<compile_context>
chip_gen: v7x
topology: tpu7x:2x2x1
jax: 0.10.0
libtpu: 0.0.40
codegen_flags: <defaults>
</compile_context>

<pallas_src>
import math
import functools

import jax
import jax.numpy as jnp
import numpy as np
from jax.experimental import pallas as pl
from jax.experimental.pallas import tpu as pltpu


# -----------------------------------------------------------------------------
# Fused kernel: one encoder layer per (batch_chunk, layer) grid step, with x
# carried in the VMEM-resident output block across the layer axis.
# -----------------------------------------------------------------------------
def encoder_stack_kernel(
    x0_ref,                      # [rows, D] f32   seed activation (emb*sqrt(D)+pe)
    wqkv_ref,                    # [1, 3H, D, dh]  bf16  (q part pre-scaled by 1/sqrt(dh))
    bqkv_ref,                    # [1, 3H, 1, dh]  f32   (q part pre-scaled)
    wo_ref,                      # [1, H, dh, D]   bf16
    w1_ref,                      # [1, D, F]       bf16
    w2_ref,                      # [1, F, D]       bf16
    vecs_ref,                    # [1, 8, W] f32   packed: bo,g1,be1,bf1,bf2,g2,be2,pad
    out_ref,                     # [rows, D] f32   resident activation / final output
    *, rows, batch, seq, num_heads, depth, d_model, d_ff,
):
    H, dh, S, D, F = num_heads, depth, seq, d_model, d_ff
    Bc, N = batch, rows          # batch elements in this chunk, N = Bc * S
    l = pl.program_id(1)

    # Seed the resident output block once per batch chunk (layer 0).
    @pl.when(l == 0)
    def _():
        out_ref[...] = x0_ref[...]

    x = out_ref[...]                              # [N, D] f32, VMEM-resident
    x_bf = x.astype(jnp.bfloat16)

    # Packed per-layer row vectors (single DMA per step).
    vecs = vecs_ref[0]                            # [8, W] f32
    bo, g1, be1 = vecs[0:1, :D], vecs[1:2, :D], vecs[2:3, :D]
    bf1 = vecs[3:4, :F]
    bf2, g2, be2 = vecs[4:5, :D], vecs[5:6, :D], vecs[6:7, :D]

    # ---- fused head-major QKV projection (bf16 x bf16 -> f32 accumulate) ----
    # One batched matmul over 3H heads; no per-head slicing / stacking.
    x_b = jnp.broadcast_to(x_bf[None], (3 * H, N, D))
    qkv = jnp.einsum('hnd,hdk->hnk', x_b, wqkv_ref[0],
                     preferred_element_type=jnp.float32) + bqkv_ref[0]  # [3H,N,dh]

    def to_heads(t):             # [H, N, dh] -> [H*Bc, S, dh] (bf16 attn operands)
        return t.reshape(H * Bc, S, dh).astype(jnp.bfloat16)

    q = to_heads(qkv[0:H])       # already scaled by 1/sqrt(dh) via the weights
    k = to_heads(qkv[H:2 * H])
    v = to_heads(qkv[2 * H:3 * H])

    # ---- batched scaled dot-product attention over all (head, batch) pairs ----
    # TODO(synk): for seq >~ 1-2K replace the materialized [H*Bc, S, S] logits
    # with a KV-block online-softmax (flash-style) inner loop.
    logits = jnp.einsum('gqd,gkd->gqk', q, k,
                        preferred_element_type=jnp.float32)             # [H*Bc,S,S]
    m = jnp.max(logits, axis=-1, keepdims=True)
    e = jnp.exp(logits - m)
    p = e * pl.reciprocal(jnp.sum(e, axis=-1, keepdims=True), approx=True)
    ctx = jnp.einsum('gqk,gkd->gqd', p.astype(jnp.bfloat16), v,
                     preferred_element_type=jnp.float32)                # [H*Bc,S,dh]

    # ---- head merge + output projection: per-head matmul, summed over heads
    # (== concat(heads) @ wo), no lane-dim concatenation.
    ctx_h = ctx.reshape(H, N, dh).astype(jnp.bfloat16)
    mha = jnp.sum(jnp.einsum('hnd,hde->hne', ctx_h, wo_ref[0],
                             preferred_element_type=jnp.float32),
                  axis=0) + bo                                          # [N, D]

    def layernorm(y, g, b):
        # single-pass: E[x], E[x^2]
        mu = jnp.mean(y, axis=-1, keepdims=True)
        ms = jnp.mean(y * y, axis=-1, keepdims=True)
        return (y - mu) * jax.lax.rsqrt(ms - mu * mu + 1e-5) * g + b

    o1 = layernorm(x + mha, g1, be1)

    # ---- position-wise FFN ----
    # TODO(synk): for large d_ff on v7x (64 MiB VMEM), tile w1/w2 over F with an
    # inner pipeline instead of holding the full [D,F]/[F,D] blocks.
    h1 = jnp.dot(o1.astype(jnp.bfloat16), w1_ref[0],
                 preferred_element_type=jnp.float32) + bf1
    h1 = jnp.maximum(h1, 0.0)
    ffn = jnp.dot(h1.astype(jnp.bfloat16), w2_ref[0],
                  preferred_element_type=jnp.float32) + bf2

    out_ref[...] = layernorm(o1 + ffn, g2, be2)


# -----------------------------------------------------------------------------
# Wrapper: stack per-layer params ([L, ...]), launch the single fused kernel.
# -----------------------------------------------------------------------------
def encoder_forward(tokens, emb_table, pe, layers, *, d_model, num_heads,
                    batch_chunks=None):
    B, S = tokens.shape
    D = d_model
    BS = B * S
    L = len(layers)
    F = layers[0]["w1"].shape[1]
    H = num_heads
    dh = D // H

    # Batch-parallel leading grid axis (2 chunks -> both TCs on v7x megacore;
    # harmless serial loop on single-TC v5e/v6e).
    if batch_chunks is None:
        batch_chunks = 2 if (B % 2 == 0 and B >= 2) else 1
    assert B % batch_chunks == 0
    Bc = B // batch_chunks
    rows = Bc * S

    # Glue in XLA: embedding gather is data-dependent; fold scale + PE add here
    # so the kernel keeps no cold-path [BS, D] inputs beyond the seed.
    x0 = emb_table[tokens].astype(jnp.float32) * math.sqrt(float(D))
    # NOTE: reproduces the module: pe is sliced by the *batch* index and
    # broadcast over the sequence dimension (pe[:x.size(0)] with batch-first x).
    x0 = (x0 + pe[:B][:, None, :]).reshape(BS, D)

    bf16 = jnp.bfloat16
    inv_sqrt_dk = 1.0 / math.sqrt(float(dh))

    def head_major_w(w):         # [D, D] -> [H, D, dh]
        return w.reshape(D, H, dh).transpose(1, 0, 2)

    def head_major_b(b):         # [1, D] -> [H, 1, dh]
        return b.reshape(H, 1, dh)

    # Fold 1/sqrt(dk) into the q weights/bias (free: no in-kernel scale pass).
    wqkv = jnp.stack([
        jnp.concatenate([head_major_w(p["wq"]) * inv_sqrt_dk,
                         head_major_w(p["wk"]),
                         head_major_w(p["wv"])], axis=0)     # [3H, D, dh]
        for p in layers]).astype(bf16)                        # [L, 3H, D, dh]
    bqkv = jnp.stack([
        jnp.concatenate([head_major_b(p["bq"]) * inv_sqrt_dk,
                         head_major_b(p["bk"]),
                         head_major_b(p["bv"])], axis=0)      # [3H, 1, dh]
        for p in layers]).astype(jnp.float32)                 # [L, 3H, 1, dh]
    wo = jnp.stack([p["wo"].reshape(H, dh, D) for p in layers]).astype(bf16)
    w1 = jnp.stack([p["w1"] for p in layers]).astype(bf16)    # [L, D, F]
    w2 = jnp.stack([p["w2"] for p in layers]).astype(bf16)    # [L, F, D]

    # Pack the small per-layer row vectors into one [L, 8, W] array.
    W = max(D, F)

    def padW(v, n):
        return jnp.pad(v.reshape(-1).astype(jnp.float32), (0, W - n))

    vecs = jnp.stack([
        jnp.stack([padW(p["bo"], D), padW(p["g1"], D), padW(p["be1"], D),
                   padW(p["bf1"], F), padW(p["bf2"], D), padW(p["g2"], D),
                   padW(p["be2"], D), jnp.zeros((W,), jnp.float32)])
        for p in layers])                                     # [L, 8, W]

    def wspec(shape):
        nd = len(shape)
        return pl.BlockSpec((1,) + shape, lambda b, l, nd=nd: (l,) + (0,) * nd)

    kernel = functools.partial(
        encoder_stack_kernel, rows=rows, batch=Bc, seq=S,
        num_heads=H, depth=dh, d_model=D, d_ff=F)

    # TODO(synk): for real deployments pad D (and dh) to multiples of 128 so
    # the vregs/MXU are lane-dense and the final store is unmasked; the demo
    # keeps the module's D=32, dh=8.
    out2d = pl.pallas_call(
        kernel,
        out_shape=jax.ShapeDtypeStruct((BS, D), jnp.float32),
        grid_spec=pltpu.PrefetchScalarGridSpec(
            num_scalar_prefetch=0,
            grid=(batch_chunks, L),
            in_specs=[
                pl.BlockSpec((rows, D), lambda b, l: (b, 0)),   # x0 seed
                wspec((3 * H, D, dh)),                          # fused qkv weights
                wspec((3 * H, 1, dh)),                          # fused qkv bias
                wspec((H, dh, D)),                              # wo (head-major rows)
                wspec((D, F)),                                  # ffn w1
                wspec((F, D)),                                  # ffn w2
                wspec((8, W)),                                  # packed small vectors
            ],
            out_specs=pl.BlockSpec((rows, D), lambda b, l: (b, 0)),
        ),
        compiler_params=pltpu.CompilerParams(
            dimension_semantics=("parallel", "arbitrary"),
            vmem_limit_bytes=32 * 1024 * 1024),
    )(x0, wqkv, bqkv, wo, w1, w2, vecs)

    return out2d.reshape(B, S, D)


# -----------------------------------------------------------------------------
# Parameter init (deterministic) + positional encoding
# -----------------------------------------------------------------------------
def make_positional_encoding(max_len, d_model):
    position = jnp.arange(max_len, dtype=jnp.float32)[:, None]
    div_term = jnp.exp(
        jnp.arange(0, d_model, 2, dtype=jnp.float32) * (-math.log(10000.0) / d_model)
    )
    pe = jnp.zeros((max_len, d_model), dtype=jnp.float32)
    pe = pe.at[:, 0::2].set(jnp.sin(position * div_term))
    pe = pe.at[:, 1::2].set(jnp.cos(position * div_term))
    return pe  # [max_len, d_model]


def init_params(key, num_layers, d_model, d_ff, vocab_size):
    keys = jax.random.split(key, 1 + num_layers)
    emb = jax.random.normal(keys[0], (vocab_size, d_model), jnp.float32) * 0.02
    layers = []
    for l in range(num_layers):
        ks = jax.random.split(keys[1 + l], 8)

        def lin(k, din, dout):
            return jax.random.normal(k, (din, dout), jnp.float32) * 0.05

        layers.append(dict(
            wq=lin(ks[0], d_model, d_model), bq=jnp.zeros((1, d_model), jnp.float32),
            wk=lin(ks[1], d_model, d_model), bk=jnp.zeros((1, d_model), jnp.float32),
            wv=lin(ks[2], d_model, d_model), bv=jnp.zeros((1, d_model), jnp.float32),
            wo=lin(ks[3], d_model, d_model), bo=jnp.zeros((1, d_model), jnp.float32),
            g1=jnp.ones((1, d_model), jnp.float32), be1=jnp.zeros((1, d_model), jnp.float32),
            w1=lin(ks[4], d_model, d_ff), bf1=jnp.zeros((1, d_ff), jnp.float32),
            w2=lin(ks[5], d_ff, d_model), bf2=jnp.zeros((1, d_model), jnp.float32),
            g2=jnp.ones((1, d_model), jnp.float32), be2=jnp.zeros((1, d_model), jnp.float32),
        ))
    return emb, layers


# -----------------------------------------------------------------------------
# Pure-JAX f32 reference (module semantics) for a correctness sanity check
# -----------------------------------------------------------------------------
def encoder_reference(tokens, emb_table, pe, layers, *, d_model, num_heads):
    B, S = tokens.shape
    depth = d_model // num_heads
    x = emb_table[tokens] * math.sqrt(float(d_model)) + pe[:B].reshape(B, 1, d_model)

    def ln(y, g, b):
        mu = jnp.mean(y, axis=-1, keepdims=True)
        var = jnp.mean((y - mu) ** 2, axis=-1, keepdims=True)
        return (y - mu) / jnp.sqrt(var + 1e-5) * g + b

    for p in layers:
        q = x @ p["wq"] + p["bq"]
        k = x @ p["wk"] + p["bk"]
        v = x @ p["wv"] + p["bv"]

        def split(t):  # [B,S,D] -> [B,H,S,depth]
            return t.reshape(B, S, num_heads, depth).transpose(0, 2, 1, 3)

        qh, kh, vh = split(q), split(k), split(v)
        logits = jnp.einsum("bhsd,bhtd->bhst", qh, kh) / math.sqrt(float(depth))
        w = jax.nn.softmax(logits, axis=-1)
        a = jnp.einsum("bhst,bhtd->bhsd", w, vh).transpose(0, 2, 1, 3).reshape(B, S, d_model)
        a = a @ p["wo"] + p["bo"]
        o1 = ln(x + a, p["g1"], p["be1"])
        f = jnp.maximum(o1 @ p["w1"] + p["bf1"], 0.0) @ p["w2"] + p["bf2"]
        x = ln(o1 + f, p["g2"], p["be2"])
    return x


if __name__ == "__main__":
    # Small, module-consistent shapes.
    num_layers = 2
    d_model = 32
    num_heads = 4
    d_ff = 64
    vocab_size = 50
    max_seq_len = 16
    B, S = 2, 8

    key = jax.random.PRNGKey(0)
    k_tok, k_par = jax.random.split(key)
    tokens = jax.random.randint(k_tok, (B, S), 0, vocab_size, dtype=jnp.int32)

    emb_table, layers = init_params(k_par, num_layers, d_model, d_ff, vocab_size)
    pe = make_positional_encoding(max_seq_len, d_model)

    out = encoder_forward(tokens, emb_table, pe, layers,
                          d_model=d_model, num_heads=num_heads)
    out = jax.block_until_ready(out)

    ref = encoder_reference(tokens, emb_table, pe, layers,
                            d_model=d_model, num_heads=num_heads)
    # Tolerance loosened vs a pure-f32 kernel: all matmul operands are bf16 and
    # the softmax denominator uses the approximate EUP reciprocal.
    np.testing.assert_allclose(np.asarray(out), np.asarray(ref), atol=5e-2, rtol=5e-2)

    print("KERNEL_OK")
</pallas_src>

<mosaic_0001>
module attributes {stable_mosaic.version = 11 : i64} {
  func.func @encoder_stack_kernel(%arg0: i32, %arg1: i32, %arg2: memref<8x32xf32, #tpu.memory_space<vmem>>, %arg3: memref<1x12x32x8xbf16, #tpu.memory_space<vmem>>, %arg4: memref<1x12x1x8xf32, #tpu.memory_space<vmem>>, %arg5: memref<1x4x8x32xbf16, #tpu.memory_space<vmem>>, %arg6: memref<1x32x64xbf16, #tpu.memory_space<vmem>>, %arg7: memref<1x64x32xbf16, #tpu.memory_space<vmem>>, %arg8: memref<1x8x64xf32, #tpu.memory_space<vmem>>, %arg9: memref<8x32xf32, #tpu.memory_space<vmem>>) attributes {dimension_semantics = [#tpu.dimension_semantics<parallel>, #tpu.dimension_semantics<arbitrary>], iteration_bounds = array<i64: 2, 2>, scalar_prefetch = 0 : i64, scratch_operands = 0 : i64, tpu.core_type = #tpu.core_type<tc>, window_params = [{transform_indices = @transform_0, window_bounds = array<i64: 8, 32>}, {transform_indices = @transform_1, window_bounds = array<i64: 1, 12, 32, 8>}, {transform_indices = @transform_2, window_bounds = array<i64: 1, 12, 1, 8>}, {transform_indices = @transform_3, window_bounds = array<i64: 1, 4, 8, 32>}, {transform_indices = @transform_4, window_bounds = array<i64: 1, 32, 64>}, {transform_indices = @transform_5, window_bounds = array<i64: 1, 64, 32>}, {transform_indices = @transform_6, window_bounds = array<i64: 1, 8, 64>}, {transform_indices = @transform_7, window_bounds = array<i64: 8, 32>}]} {
    %c0_i32 = arith.constant 0 : i32
    %0 = arith.cmpi eq, %arg1, %c0_i32 : i32
    %1 = arith.extui %0 : i1 to i32
    %c0_i32_0 = arith.constant 0 : i32
    %2 = arith.cmpi ne, %1, %c0_i32_0 : i32
    scf.if %2 {
      %c0_44 = arith.constant 0 : index
      %c0_45 = arith.constant 0 : index
      %111 = vector.load %arg2[%c0_44, %c0_45] : memref<8x32xf32, #tpu.memory_space<vmem>>, vector<8x32xf32>
      %c0_46 = arith.constant 0 : index
      %c0_47 = arith.constant 0 : index
      %112 = vector.load %arg9[%c0_46, %c0_47] : memref<8x32xf32, #tpu.memory_space<vmem>>, vector<8x32xf32>
      tpu.vector_store %arg9[%c0_46, %c0_47], %111 {strides = array<i32>} : memref<8x32xf32, #tpu.memory_space<vmem>>, vector<8x32xf32>,
    } else {
    }
    %c0 = arith.constant 0 : index
    %c0_1 = arith.constant 0 : index
    %3 = vector.load %arg9[%c0, %c0_1] : memref<8x32xf32, #tpu.memory_space<vmem>>, vector<8x32xf32>
    %4 = arith.truncf %3 : vector<8x32xf32> to vector<8x32xbf16>
    %c0_2 = arith.constant 0 : index
    %c0_3 = arith.constant 0 : index
    %c0_4 = arith.constant 0 : index
    %5 = vector.load %arg8[%c0_2, %c0_3, %c0_4] : memref<1x8x64xf32, #tpu.memory_space<vmem>>, vector<1x8x64xf32>
    %6 = vector.shape_cast %5 : vector<1x8x64xf32> to vector<8x64xf32>
    %7 = vector.extract_strided_slice %6 {offsets = [0, 0], sizes = [1, 32], strides = [1, 1]} : vector<8x64xf32> to vector<1x32xf32>
    %8 = vector.extract_strided_slice %6 {offsets = [1, 0], sizes = [1, 32], strides = [1, 1]} : vector<8x64xf32> to vector<1x32xf32>
    %9 = vector.extract_strided_slice %6 {offsets = [2, 0], sizes = [1, 32], strides = [1, 1]} : vector<8x64xf32> to vector<1x32xf32>
    %10 = vector.extract_strided_slice %6 {offsets = [3, 0], sizes = [1, 64], strides = [1, 1]} : vector<8x64xf32> to vector<1x64xf32>
    %11 = vector.extract_strided_slice %6 {offsets = [4, 0], sizes = [1, 32], strides = [1, 1]} : vector<8x64xf32> to vector<1x32xf32>
    %12 = vector.extract_strided_slice %6 {offsets = [5, 0], sizes = [1, 32], strides = [1, 1]} : vector<8x64xf32> to vector<1x32xf32>
    %13 = vector.extract_strided_slice %6 {offsets = [6, 0], sizes = [1, 32], strides = [1, 1]} : vector<8x64xf32> to vector<1x32xf32>
    %14 = vector.shape_cast %4 : vector<8x32xbf16> to vector<1x8x32xbf16>
    %15 = vector.shape_cast %14 : vector<1x8x32xbf16> to vector<1x8x32xbf16>
    %16 = vector.broadcast %15 : vector<1x8x32xbf16> to vector<12x8x32xbf16>
    %c0_5 = arith.constant 0 : index
    %c0_6 = arith.constant 0 : index
    %c0_7 = arith.constant 0 : index
    %c0_8 = arith.constant 0 : index
    %17 = vector.load %arg3[%c0_5, %c0_6, %c0_7, %c0_8] : memref<1x12x32x8xbf16, #tpu.memory_space<vmem>>, vector<1x12x32x8xbf16>
    %18 = vector.shape_cast %17 : vector<1x12x32x8xbf16> to vector<12x32x8xbf16>
    "tpu.trace_start"() <{level = 10 : i32, message = "hnd,hdk->hnk"}> : () -> ()
    %cst = arith.constant dense<0.000000e+00> : vector<12x8x8xf32>
    %19 = tpu.matmul %16, %18, %cst {dimension_numbers = #tpu.dot_dimension_numbers<[2], [1], [1], [2], [0, 0, 0, 1, 1, 2], [0], [0]>} : vector<12x8x32xbf16>, vector<12x32x8xbf16>, vector<12x8x8xf32> -> vector<12x8x8xf32>
    "tpu.trace_stop"() : () -> ()
    %c0_9 = arith.constant 0 : index
    %c0_10 = arith.constant 0 : index
    %c0_11 = arith.constant 0 : index
    %c0_12 = arith.constant 0 : index
    %20 = vector.load %arg4[%c0_9, %c0_10, %c0_11, %c0_12] : memref<1x12x1x8xf32, #tpu.memory_space<vmem>>, vector<1x12x1x8xf32>
    %21 = vector.shape_cast %20 : vector<1x12x1x8xf32> to vector<12x1x8xf32>
    %22 = vector.broadcast %21 : vector<12x1x8xf32> to vector<12x8x8xf32>
    %23 = arith.addf %19, %22 : vector<12x8x8xf32>
    %24 = vector.extract_strided_slice %23 {offsets = [0, 0, 0], sizes = [4, 8, 8], strides = [1, 1, 1]} : vector<12x8x8xf32> to vector<4x8x8xf32>
    %25 = arith.truncf %24 : vector<4x8x8xf32> to vector<4x8x8xbf16>
    %26 = vector.extract_strided_slice %23 {offsets = [4, 0, 0], sizes = [4, 8, 8], strides = [1, 1, 1]} : vector<12x8x8xf32> to vector<4x8x8xf32>
    %27 = arith.truncf %26 : vector<4x8x8xf32> to vector<4x8x8xbf16>
    %28 = vector.extract_strided_slice %23 {offsets = [8, 0, 0], sizes = [4, 8, 8], strides = [1, 1, 1]} : vector<12x8x8xf32> to vector<4x8x8xf32>
    %29 = arith.truncf %28 : vector<4x8x8xf32> to vector<4x8x8xbf16>
    "tpu.trace_start"() <{level = 10 : i32, message = "gqd,gkd->gqk"}> : () -> ()
    %cst_13 = arith.constant dense<0.000000e+00> : vector<4x8x8xf32>
    %30 = tpu.matmul %25, %27, %cst_13 {dimension_numbers = #tpu.dot_dimension_numbers<[2], [2], [1], [1], [0, 0, 0, 1, 1, 1], [0], [0]>} : vector<4x8x8xbf16>, vector<4x8x8xbf16>, vector<4x8x8xf32> -> vector<4x8x8xf32>
    "tpu.trace_stop"() : () -> ()
    %cst_14 = arith.constant dense<0xFF800000> : vector<4x8xf32>
    %31 = vector.multi_reduction <maximumf>, %30, %cst_14 [2] : vector<4x8x8xf32> to vector<4x8xf32>
    %32 = vector.shape_cast %31 : vector<4x8xf32> to vector<4x8x1xf32>
    %33 = vector.broadcast %32 : vector<4x8x1xf32> to vector<4x8x8xf32>
    %34 = arith.subf %30, %33 : vector<4x8x8xf32>
    %35 = math.exp %34 : vector<4x8x8xf32>
    %cst_15 = arith.constant dense<0.000000e+00> : vector<4x8xf32>
    %36 = vector.multi_reduction <add>, %35, %cst_15 [2] : vector<4x8x8xf32> to vector<4x8xf32>
    %37 = vector.shape_cast %36 : vector<4x8xf32> to vector<4x8x1xf32>
    %38 = tpu.reciprocal %37 {approx = true} : vector<4x8x1xf32> -> vector<4x8x1xf32>
    %39 = vector.broadcast %38 : vector<4x8x1xf32> to vector<4x8x8xf32>
    %40 = arith.mulf %35, %39 : vector<4x8x8xf32>
    %41 = arith.truncf %40 : vector<4x8x8xf32> to vector<4x8x8xbf16>
    "tpu.trace_start"() <{level = 10 : i32, message = "gqk,gkd->gqd"}> : () -> ()
    %cst_16 = arith.constant dense<0.000000e+00> : vector<4x8x8xf32>
    %42 = tpu.matmul %41, %29, %cst_16 {dimension_numbers = #tpu.dot_dimension_numbers<[2], [1], [1], [2], [0, 0, 0, 1, 1, 2], [0], [0]>} : vector<4x8x8xbf16>, vector<4x8x8xbf16>, vector<4x8x8xf32> -> vector<4x8x8xf32>
    "tpu.trace_stop"() : () -> ()
    %43 = arith.truncf %42 : vector<4x8x8xf32> to vector<4x8x8xbf16>
    %c0_17 = arith.constant 0 : index
    %c0_18 = arith.constant 0 : index
    %c0_19 = arith.constant 0 : index
    %c0_20 = arith.constant 0 : index
    %44 = vector.load %arg5[%c0_17, %c0_18, %c0_19, %c0_20] : memref<1x4x8x32xbf16, #tpu.memory_space<vmem>>, vector<1x4x8x32xbf16>
    %45 = vector.shape_cast %44 : vector<1x4x8x32xbf16> to vector<4x8x32xbf16>
    "tpu.trace_start"() <{level = 10 : i32, message = "hnd,hde->hne"}> : () -> ()
    %cst_21 = arith.constant dense<0.000000e+00> : vector<4x8x32xf32>
    %46 = tpu.matmul %43, %45, %cst_21 {dimension_numbers = #tpu.dot_dimension_numbers<[2], [1], [1], [2], [0, 0, 0, 1, 1, 2], [0], [0]>} : vector<4x8x8xbf16>, vector<4x8x32xbf16>, vector<4x8x32xf32> -> vector<4x8x32xf32>
    "tpu.trace_stop"() : () -> ()
    %cst_22 = arith.constant dense<0.000000e+00> : vector<8x32xf32>
    %47 = vector.multi_reduction <add>, %46, %cst_22 [0] : vector<4x8x32xf32> to vector<8x32xf32>
    %48 = vector.broadcast %7 : vector<1x32xf32> to vector<8x32xf32>
    %49 = arith.addf %47, %48 : vector<8x32xf32>
    %50 = arith.addf %3, %49 : vector<8x32xf32>
    %cst_23 = arith.constant dense<0.000000e+00> : vector<8xf32>
    %51 = vector.multi_reduction <add>, %50, %cst_23 [1] : vector<8x32xf32> to vector<8xf32>
    %52 = vector.shape_cast %51 : vector<8xf32> to vector<8x1xf32>
    %cst_24 = arith.constant 3.200000e+01 : f32
    %53 = vector.broadcast %cst_24 : f32 to vector<8x1xf32>
    %54 = arith.divf %52, %53 : vector<8x1xf32>
    %55 = arith.mulf %50, %50 : vector<8x32xf32>
    %cst_25 = arith.constant dense<0.000000e+00> : vector<8xf32>
    %56 = vector.multi_reduction <add>, %55, %cst_25 [1] : vector<8x32xf32> to vector<8xf32>
    %57 = vector.shape_cast %56 : vector<8xf32> to vector<8x1xf32>
    %cst_26 = arith.constant 3.200000e+01 : f32
    %58 = vector.broadcast %cst_26 : f32 to vector<8x1xf32>
    %59 = arith.divf %57, %58 : vector<8x1xf32>
    %60 = vector.broadcast %54 : vector<8x1xf32> to vector<8x32xf32>
    %61 = arith.subf %50, %60 : vector<8x32xf32>
    %62 = arith.mulf %54, %54 : vector<8x1xf32>
    %63 = arith.subf %59, %62 : vector<8x1xf32>
    %cst_27 = arith.constant 9.99999974E-6 : f32
    %64 = vector.broadcast %cst_27 : f32 to vector<8x1xf32>
    %65 = arith.addf %63, %64 : vector<8x1xf32>
    %66 = math.rsqrt %65 : vector<8x1xf32>
    %67 = vector.broadcast %66 : vector<8x1xf32> to vector<8x32xf32>
    %68 = arith.mulf %61, %67 : vector<8x32xf32>
    %69 = vector.broadcast %8 : vector<1x32xf32> to vector<8x32xf32>
    %70 = arith.mulf %68, %69 : vector<8x32xf32>
    %71 = vector.broadcast %9 : vector<1x32xf32> to vector<8x32xf32>
    %72 = arith.addf %70, %71 : vector<8x32xf32>
    %73 = arith.truncf %72 : vector<8x32xf32> to vector<8x32xbf16>
    %c0_28 = arith.constant 0 : index
    %c0_29 = arith.constant 0 : index
    %c0_30 = arith.constant 0 : index
    %74 = vector.load %arg6[%c0_28, %c0_29, %c0_30] : memref<1x32x64xbf16, #tpu.memory_space<vmem>>, vector<1x32x64xbf16>
    %75 = vector.shape_cast %74 : vector<1x32x64xbf16> to vector<32x64xbf16>
    %cst_31 = arith.constant dense<0.000000e+00> : vector<8x64xf32>
    %76 = tpu.matmul %73, %75, %cst_31 {dimension_numbers = #tpu.dot_dimension_numbers<[1], [0], [0], [1], [0, 0, 1, 1], [], []>} : vector<8x32xbf16>, vector<32x64xbf16>, vector<8x64xf32> -> vector<8x64xf32>
    %77 = vector.broadcast %10 : vector<1x64xf32> to vector<8x64xf32>
    %78 = arith.addf %76, %77 : vector<8x64xf32>
    %cst_32 = arith.constant 0.000000e+00 : f32
    %79 = vector.broadcast %cst_32 : f32 to vector<8x64xf32>
    %80 = arith.maximumf %78, %79 : vector<8x64xf32>
    %81 = arith.truncf %80 : vector<8x64xf32> to vector<8x64xbf16>
    %c0_33 = arith.constant 0 : index
    %c0_34 = arith.constant 0 : index
    %c0_35 = arith.constant 0 : index
    %82 = vector.load %arg7[%c0_33, %c0_34, %c0_35] : memref<1x64x32xbf16, #tpu.memory_space<vmem>>, vector<1x64x32xbf16>
    %83 = vector.shape_cast %82 : vector<1x64x32xbf16> to vector<64x32xbf16>
    %cst_36 = arith.constant dense<0.000000e+00> : vector<8x32xf32>
    %84 = tpu.matmul %81, %83, %cst_36 {dimension_numbers = #tpu.dot_dimension_numbers<[1], [0], [0], [1], [0, 0, 1, 1], [], []>} : vector<8x64xbf16>, vector<64x32xbf16>, vector<8x32xf32> -> vector<8x32xf32>
    %85 = vector.broadcast %11 : vector<1x32xf32> to vector<8x32xf32>
    %86 = arith.addf %84, %85 : vector<8x32xf32>
    %87 = arith.addf %72, %86 : vector<8x32xf32>
    %cst_37 = arith.constant dense<0.000000e+00> : vector<8xf32>
    %88 = vector.multi_reduction <add>, %87, %cst_37 [1] : vector<8x32xf32> to vector<8xf32>
    %89 = vector.shape_cast %88 : vector<8xf32> to vector<8x1xf32>
    %cst_38 = arith.constant 3.200000e+01 : f32
    %90 = vector.broadcast %cst_38 : f32 to vector<8x1xf32>
    %91 = arith.divf %89, %90 : vector<8x1xf32>
    %92 = arith.mulf %87, %87 : vector<8x32xf32>
    %cst_39 = arith.constant dense<0.000000e+00> : vector<8xf32>
    %93 = vector.multi_reduction <add>, %92, %cst_39 [1] : vector<8x32xf32> to vector<8xf32>
    %94 = vector.shape_cast %93 : vector<8xf32> to vector<8x1xf32>
    %cst_40 = arith.constant 3.200000e+01 : f32
    %95 = vector.broadcast %cst_40 : f32 to vector<8x1xf32>
    %96 = arith.divf %94, %95 : vector<8x1xf32>
    %97 = vector.broadcast %91 : vector<8x1xf32> to vector<8x32xf32>
    %98 = arith.subf %87, %97 : vector<8x32xf32>
    %99 = arith.mulf %91, %91 : vector<8x1xf32>
    %100 = arith.subf %96, %99 : vector<8x1xf32>
    %cst_41 = arith.constant 9.99999974E-6 : f32
    %101 = vector.broadcast %cst_41 : f32 to vector<8x1xf32>
    %102 = arith.addf %100, %101 : vector<8x1xf32>
    %103 = math.rsqrt %102 : vector<8x1xf32>
    %104 = vector.broadcast %103 : vector<8x1xf32> to vector<8x32xf32>
    %105 = arith.mulf %98, %104 : vector<8x32xf32>
    %106 = vector.broadcast %12 : vector<1x32xf32> to vector<8x32xf32>
    %107 = arith.mulf %105, %106 : vector<8x32xf32>
    %108 = vector.broadcast %13 : vector<1x32xf32> to vector<8x32xf32>
    %109 = arith.addf %107, %108 : vector<8x32xf32>
    %c0_42 = arith.constant 0 : index
    %c0_43 = arith.constant 0 : index
    %110 = vector.load %arg9[%c0_42, %c0_43] : memref<8x32xf32, #tpu.memory_space<vmem>>, vector<8x32xf32>
    tpu.vector_store %arg9[%c0_42, %c0_43], %109 {strides = array<i32>} : memref<8x32xf32, #tpu.memory_space<vmem>>, vector<8x32xf32>,
    return
  }
  func.func @transform_0(%arg0: i32, %arg1: i32) -> (i32, i32) {
    %c0_i32 = arith.constant 0 : i32
    %c0_i32_0 = arith.constant 0 : i32
    return %arg0, %c0_i32 : i32, i32
  }
  func.func @transform_1(%arg0: i32, %arg1: i32) -> (i32, i32, i32, i32) {
    %c0_i32 = arith.constant 0 : i32
    %c0_i32_0 = arith.constant 0 : i32
    %c0_i32_1 = arith.constant 0 : i32
    %c0_i32_2 = arith.constant 0 : i32
    return %arg1, %c0_i32, %c0_i32_0, %c0_i32_1 : i32, i32, i32, i32
  }
  func.func @transform_2(%arg0: i32, %arg1: i32) -> (i32, i32, i32, i32) {
    %c0_i32 = arith.constant 0 : i32
    %c0_i32_0 = arith.constant 0 : i32
    %c0_i32_1 = arith.constant 0 : i32
    %c0_i32_2 = arith.constant 0 : i32
    return %arg1, %c0_i32, %c0_i32_0, %c0_i32_1 : i32, i32, i32, i32
  }
  func.func @transform_3(%arg0: i32, %arg1: i32) -> (i32, i32, i32, i32) {
    %c0_i32 = arith.constant 0 : i32
    %c0_i32_0 = arith.constant 0 : i32
    %c0_i32_1 = arith.constant 0 : i32
    %c0_i32_2 = arith.constant 0 : i32
    return %arg1, %c0_i32, %c0_i32_0, %c0_i32_1 : i32, i32, i32, i32
  }
  func.func @transform_4(%arg0: i32, %arg1: i32) -> (i32, i32, i32) {
    %c0_i32 = arith.constant 0 : i32
    %c0_i32_0 = arith.constant 0 : i32
    %c0_i32_1 = arith.constant 0 : i32
    return %arg1, %c0_i32, %c0_i32_0 : i32, i32, i32
  }
  func.func @transform_5(%arg0: i32, %arg1: i32) -> (i32, i32, i32) {
    %c0_i32 = arith.constant 0 : i32
    %c0_i32_0 = arith.constant 0 : i32
    %c0_i32_1 = arith.constant 0 : i32
    return %arg1, %c0_i32, %c0_i32_0 : i32, i32, i32
  }
  func.func @transform_6(%arg0: i32, %arg1: i32) -> (i32, i32, i32) {
    %c0_i32 = arith.constant 0 : i32
    %c0_i32_0 = arith.constant 0 : i32
    %c0_i32_1 = arith.constant 0 : i32
    return %arg1, %c0_i32, %c0_i32_0 : i32, i32, i32
  }
  func.func @transform_7(%arg0: i32, %arg1: i32) -> (i32, i32) {
    %c0_i32 = arith.constant 0 : i32
    %c0_i32_0 = arith.constant 0 : i32
    return %arg0, %c0_i32 : i32, i32
  }
}

</mosaic_0001>

<llo_original>
// kernel: tpu_custom_call.1
$region0: #{tpu_custom_call.1}
  #allocation0 [shape = 'u32[]', space=smem, size = 0x4, offset = 0x4, fixed_abs, tag = 'smem constant byte address 0x4 - core index']
  #allocation1 [shape = 'u32[144,128]{1,0:T(1,128)}', space=vmem, size = 0x12000, scoped, tag = 'internal scratch']
  %s0 = inlined_call_operand.vmem [shape: f32[16,32], index: 0, kind: input, shape index: {}]
  %s1 = inlined_call_operand.vmem [shape: bf16[2,12,32,8], index: 1, kind: input, shape index: {}]
  %s2 = inlined_call_operand.vmem [shape: f32[2,12,1,8], index: 2, kind: input, shape index: {}]
  %s3 = inlined_call_operand.vmem [shape: bf16[2,4,8,32], index: 3, kind: input, shape index: {}]
  %s4 = inlined_call_operand.vmem [shape: bf16[2,32,64], index: 4, kind: input, shape index: {}]
  %s5 = inlined_call_operand.vmem [shape: bf16[2,64,32], index: 5, kind: input, shape index: {}]
  %s6 = inlined_call_operand.vmem [shape: f32[2,8,64], index: 6, kind: input, shape index: {}]
  %s7 = inlined_call_operand.hbm [shape: f32[16,32], index: 7, kind: output, shape index: {}]
  %s8 = sld [smem:[#allocation0]]
  $region65: #{tpu_custom_call.1} parent=0
    _
  %s10 = ssub.s32 1, %s8
  %s11 = scalar_select 0, %s10, %s8
  $region1: #{tpu_custom_call.1} parent=0
    #allocation2 [shape = 'u8[8192]{0}', space=vmem, size = 0x2000, scoped, tag = 'output window, operand 0']
    #allocation3 [shape = 's32[2]{0}', space=sflag, size = 0x8, scoped, tag = 'scoped memory for tpu_custom_call.1']
    %12 = vsyncpa [#allocation3], 0
    %s13 = scalar_lea.sflag [#allocation3], 1
    %14 = vsyncpa %s13, 0
    loop: start=0, step=1, limit=6
    $region2: #{tpu_custom_call.1} parent=1 // loop_pre_header
      _
    $region3: #{tpu_custom_call.1} parent=1 // loop_header
      %s16 = sphi 0, %s20
      %p17 = scmp.ge.s32.totalorder %s16, 6
      %s23 = sphi 0, %s35
      %s24 = sphi 0, %s31
      %s25 = sphi 0, %s23
      %s26 = sphi 0, %s24
      %s27 = sphi 0, %s25
      %s28 = sphi 0, %s26
      %s38 = sphi 0, %s40
      %s41 = sphi 0, %s38
      %s42 = sphi 0, %s41
      %s58 = sphi 0, %s42
      %s64 = sphi 0, %s66
      %s67 = sphi 0, %s64
      %s68 = sphi 0, %s67
      %s84 = sphi 0, %s68
      %s90 = sphi 0, %s92
      %s93 = sphi 0, %s90
      %s94 = sphi 0, %s93
      %s110 = sphi 0, %s94
      %s116 = sphi 0, %s118
      %s119 = sphi 0, %s116
      %s120 = sphi 0, %s119
      %s136 = sphi 0, %s120
      %s142 = sphi 0, %s144
      %s145 = sphi 0, %s142
      %s146 = sphi 0, %s145
      %s162 = sphi 0, %s146
      %s168 = sphi 0, %s170
      %s171 = sphi 0, %s168
      %s172 = sphi 0, %s171
      %s188 = sphi 0, %s172
      %s194 = sphi 0, %s196
      %s197 = sphi 0, %s194
      %s198 = sphi 0, %s197
      %s214 = sphi 0, %s198
      %s220 = sphi 0, %s222
      %s223 = sphi 0, %s220
      %s224 = sphi 0, %s223
      %s240 = sphi 0, %s224
    $region4: #{tpu_custom_call.1} parent=1 // loop_header_branch
      %19 = sbr.rel (%p17) target = $region8
    $region5: #{tpu_custom_call.1} parent=1 // loop_body
      %s21 = ssub.s32 %s16, 1
      %s22 = ssub.s32 %s16, 2
      %s29 = sadd.s32 1, %s24
      %p30 = scmp.ge.s32.totalorder %s29, 2
      %s31 = scalar_select %p30, 0, %s29
      %s32 = sadd.s32 1, %s23
      %s33 = scalar_select %p30, %s32, %s23
      %p34 = scmp.ge.s32.totalorder %s33, 2
      %s35 = scalar_select %p34, 0, %s33
      %s36 = ssub.s32 %s23, %s35
      %p37 = scmp.eq.s32.totalorder %s36, 0
      %s39 = sadd.s32 %s38, 1
      %s40 = scalar_select %p37, %s38, %s39
      %p43 = pneg %p37
      %p44 = scmp.eq.s32.totalorder %s16, 3
      %p45 = por %p43, %p44
      %p46 = scmp.ne.s32.totalorder %s38, %s41
      %p47 = scmp.eq.s32.totalorder %s16, 0
      %p48 = por %p46, %p47
      %p49 = scmp.ne.s32.totalorder %s38, %s41
      %p50 = scmp.eq.s32.totalorder %s21, 3
      %p51 = por %p49, %p50
      %p52 = scmp.ne.s32.totalorder %s41, %s42
      %p53 = scmp.eq.s32.totalorder %s21, 0
      %p54 = por %p52, %p53
      %p55 = scmp.ne.s32.totalorder %s41, %s42
      %p56 = scmp.eq.s32.totalorder %s22, 3
      %p57 = por %p55, %p56
      %p59 = scmp.ne.s32.totalorder %s42, %s58
      %p60 = scmp.eq.s32.totalorder %s22, 0
      %p61 = por %p59, %p60
      %s62 = ssub.s32 %s24, %s31
      %p63 = scmp.eq.s32.totalorder %s62, 0
      %s65 = sadd.s32 %s64, 1
      %s66 = scalar_select %p63, %s64, %s65
      %p69 = pneg %p63
      %p70 = scmp.eq.s32.totalorder %s16, 3
      %p71 = por %p69, %p70
      %p72 = scmp.ne.s32.totalorder %s64, %s67
      %p73 = scmp.eq.s32.totalorder %s16, 0
      %p74 = por %p72, %p73
      %p75 = scmp.ne.s32.totalorder %s64, %s67
      %p76 = scmp.eq.s32.totalorder %s21, 3
      %p77 = por %p75, %p76
      %p78 = scmp.ne.s32.totalorder %s67, %s68
      %p79 = scmp.eq.s32.totalorder %s21, 0
      %p80 = por %p78, %p79
      %p81 = scmp.ne.s32.totalorder %s67, %s68
      %p82 = scmp.eq.s32.totalorder %s22, 3
      %p83 = por %p81, %p82
      %p85 = scmp.ne.s32.totalorder %s68, %s84
      %p86 = scmp.eq.s32.totalorder %s22, 0
      %p87 = por %p85, %p86
      %s88 = ssub.s32 %s24, %s31
      %p89 = scmp.eq.s32.totalorder %s88, 0
      %s91 = sadd.s32 %s90, 1
      %s92 = scalar_select %p89, %s90, %s91
      %p95 = pneg %p89
      %p96 = scmp.eq.s32.totalorder %s16, 3
      %p97 = por %p95, %p96
      %p98 = scmp.ne.s32.totalorder %s90, %s93
      %p99 = scmp.eq.s32.totalorder %s16, 0
      %p100 = por %p98, %p99
      %p101 = scmp.ne.s32.totalorder %s90, %s93
      %p102 = scmp.eq.s32.totalorder %s21, 3
      %p103 = por %p101, %p102
      %p104 = scmp.ne.s32.totalorder %s93, %s94
      %p105 = scmp.eq.s32.totalorder %s21, 0
      %p106 = por %p104, %p105
      %p107 = scmp.ne.s32.totalorder %s93, %s94
      %p108 = scmp.eq.s32.totalorder %s22, 3
      %p109 = por %p107, %p108
      %p111 = scmp.ne.s32.totalorder %s94, %s110
      %p112 = scmp.eq.s32.totalorder %s22, 0
      %p113 = por %p111, %p112
      %s114 = ssub.s32 %s24, %s31
      %p115 = scmp.eq.s32.totalorder %s114, 0
      %s117 = sadd.s32 %s116, 1
      %s118 = scalar_select %p115, %s116, %s117
      %p121 = pneg %p115
      %p122 = scmp.eq.s32.totalorder %s16, 3
      %p123 = por %p121, %p122
      %p124 = scmp.ne.s32.totalorder %s116, %s119
      %p125 = scmp.eq.s32.totalorder %s16, 0
      %p126 = por %p124, %p125
      %p127 = scmp.ne.s32.totalorder %s116, %s119
      %p128 = scmp.eq.s32.totalorder %s21, 3
      %p129 = por %p127, %p128
      %p130 = scmp.ne.s32.totalorder %s119, %s120
      %p131 = scmp.eq.s32.totalorder %s21, 0
      %p132 = por %p130, %p131
      %p133 = scmp.ne.s32.totalorder %s119, %s120
      %p134 = scmp.eq.s32.totalorder %s22, 3
      %p135 = por %p133, %p134
      %p137 = scmp.ne.s32.totalorder %s120, %s136
      %p138 = scmp.eq.s32.totalorder %s22, 0
      %p139 = por %p137, %p138
      %s140 = ssub.s32 %s24, %s31
      %p141 = scmp.eq.s32.totalorder %s140, 0
      %s143 = sadd.s32 %s142, 1
      %s144 = scalar_select %p141, %s142, %s143
      %p147 = pneg %p141
      %p148 = scmp.eq.s32.totalorder %s16, 3
      %p149 = por %p147, %p148
      %p150 = scmp.ne.s32.totalorder %s142, %s145
      %p151 = scmp.eq.s32.totalorder %s16, 0
      %p152 = por %p150, %p151
      %p153 = scmp.ne.s32.totalorder %s142, %s145
      %p154 = scmp.eq.s32.totalorder %s21, 3
      %p155 = por %p153, %p154
      %p156 = scmp.ne.s32.totalorder %s145, %s146
      %p157 = scmp.eq.s32.totalorder %s21, 0
      %p158 = por %p156, %p157
      %p159 = scmp.ne.s32.totalorder %s145, %s146
      %p160 = scmp.eq.s32.totalorder %s22, 3
      %p161 = por %p159, %p160
      %p163 = scmp.ne.s32.totalorder %s146, %s162
      %p164 = scmp.eq.s32.totalorder %s22, 0
      %p165 = por %p163, %p164
      %s166 = ssub.s32 %s24, %s31
      %p167 = scmp.eq.s32.totalorder %s166, 0
      %s169 = sadd.s32 %s168, 1
      %s170 = scalar_select %p167, %s168, %s169
      %p173 = pneg %p167
      %p174 = scmp.eq.s32.totalorder %s16, 3
      %p175 = por %p173, %p174
      %p176 = scmp.ne.s32.totalorder %s168, %s171
      %p177 = scmp.eq.s32.totalorder %s16, 0
      %p178 = por %p176, %p177
      %p179 = scmp.ne.s32.totalorder %s168, %s171
      %p180 = scmp.eq.s32.totalorder %s21, 3
      %p181 = por %p179, %p180
      %p182 = scmp.ne.s32.totalorder %s171, %s172
      %p183 = scmp.eq.s32.totalorder %s21, 0
      %p184 = por %p182, %p183
      %p185 = scmp.ne.s32.totalorder %s171, %s172
      %p186 = scmp.eq.s32.totalorder %s22, 3
      %p187 = por %p185, %p186
      %p189 = scmp.ne.s32.totalorder %s172, %s188
      %p190 = scmp.eq.s32.totalorder %s22, 0
      %p191 = por %p189, %p190
      %s192 = ssub.s32 %s24, %s31
      %p193 = scmp.eq.s32.totalorder %s192, 0
      %s195 = sadd.s32 %s194, 1
      %s196 = scalar_select %p193, %s194, %s195
      %p199 = pneg %p193
      %p200 = scmp.eq.s32.totalorder %s16, 3
      %p201 = por %p199, %p200
      %p202 = scmp.ne.s32.totalorder %s194, %s197
      %p203 = scmp.eq.s32.totalorder %s16, 0
      %p204 = por %p202, %p203
      %p205 = scmp.ne.s32.totalorder %s194, %s197
      %p206 = scmp.eq.s32.totalorder %s21, 3
      %p207 = por %p205, %p206
      %p208 = scmp.ne.s32.totalorder %s197, %s198
      %p209 = scmp.eq.s32.totalorder %s21, 0
      %p210 = por %p208, %p209
      %p211 = scmp.ne.s32.totalorder %s197, %s198
      %p212 = scmp.eq.s32.totalorder %s22, 3
      %p213 = por %p211, %p212
      %p215 = scmp.ne.s32.totalorder %s198, %s214
      %p216 = scmp.eq.s32.totalorder %s22, 0
      %p217 = por %p215, %p216
      %s218 = ssub.s32 %s23, %s35
      %p219 = scmp.eq.s32.totalorder %s218, 0
      %s221 = sadd.s32 %s220, 1
      %s222 = scalar_select %p219, %s220, %s221
      %p225 = pneg %p219
      %p226 = scmp.eq.s32.totalorder %s16, 3
      %p227 = por %p225, %p226
      %p228 = scmp.ne.s32.totalorder %s220, %s223
      %p229 = scmp.eq.s32.totalorder %s16, 0
      %p230 = por %p228, %p229
      %p231 = scmp.ne.s32.totalorder %s220, %s223
      %p232 = scmp.eq.s32.totalorder %s21, 3
      %p233 = por %p231, %p232
      %p234 = scmp.ne.s32.totalorder %s223, %s224
      %p235 = scmp.eq.s32.totalorder %s21, 0
      %p236 = por %p234, %p235
      %p237 = scmp.ne.s32.totalorder %s223, %s224
      %p238 = scmp.eq.s32.totalorder %s22, 3
      %p239 = por %p237, %p238
      %p241 = scmp.ne.s32.totalorder %s224, %s240
      %p242 = scmp.eq.s32.totalorder %s22, 0
      %p243 = por %p241, %p242
      %p244 = scmp.le.s32.totalorder 1, %s16
      %p245 = scmp.lt.s32.totalorder %s16, 5
      %p246 = pnand %p244, %p245
      %p247 = pneg %p246
      // Predicated region
      $region9: #{tpu_custom_call.1} parent=5 // pred_check
        _
      $region10: #{tpu_custom_call.1} parent=5 // pred_check_branch
        %249 = sbr.rel (%p246) target = $region12
      $region11: #{tpu_custom_call.1} parent=5 // pred_region
        %s250 = ssub.s32 %s16, 1
      $region12: #{tpu_custom_call.1} parent=5 // pred_fallthru
        _
      %p251 = scmp.lt.s32.totalorder %s16, 4
      // Predicated region
      $region13: #{tpu_custom_call.1} parent=5 // pred_check
        %p252 = pneg %p251
      $region14: #{tpu_custom_call.1} parent=5 // pred_check_branch
        %254 = sbr.rel (%p252) target = $region16
      $region15: #{tpu_custom_call.1} parent=5 // pred_region
        // Predicated region
        $region17: #{tpu_custom_call.1} parent=15 // pred_check
          %p255 = pneg %p48
        $region18: #{tpu_custom_call.1} parent=15 // pred_check_branch
          %257 = sbr.rel (%p255) target = $region20
        $region19: #{tpu_custom_call.1} parent=15 // pred_region
          %p258 = scmp.lt.s32.totalorder %s23, 1
          %s259 = scalar_select %p258, %s23, 1
          %s260 = smul.addr %s259, 8
          %s261 = scalar_lea.vmem %s0, %s260
        $region20: #{tpu_custom_call.1} parent=15 // pred_fallthru
          _
        // Predicated region
        $region21: #{tpu_custom_call.1} parent=15 // pred_check
          %p262 = pneg %p74
        $region22: #{tpu_custom_call.1} parent=15 // pred_check_branch
          %264 = sbr.rel (%p262) target = $region24
        $region23: #{tpu_custom_call.1} parent=15 // pred_region
          %p265 = scmp.lt.s32.totalorder %s24, 1
          %s266 = scalar_select %p265, %s24, 1
          %s267 = smul.addr %s266, 48
          %s268 = smul.addr %s267, 4
          %s269 = scalar_lea.vmem %s1, %s268
        $region24: #{tpu_custom_call.1} parent=15 // pred_fallthru
          _
        // Predicated region
        $region25: #{tpu_custom_call.1} parent=15 // pred_check
          %p270 = pneg %p100
        $region26: #{tpu_custom_call.1} parent=15 // pred_check_branch
          %272 = sbr.rel (%p270) target = $region28
        $region27: #{tpu_custom_call.1} parent=15 // pred_region
          %p273 = scmp.lt.s32.totalorder %s24, 1
          %s274 = scalar_select %p273, %s24, 1
          %s275 = smul.addr %s274, 12
          %s276 = scalar_lea.vmem %s2, %s275
        $region28: #{tpu_custom_call.1} parent=15 // pred_fallthru
          _
        // Predicated region
        $region29: #{tpu_custom_call.1} parent=15 // pred_check
          %p277 = pneg %p126
        $region30: #{tpu_custom_call.1} parent=15 // pred_check_branch
          %279 = sbr.rel (%p277) target = $region32
        $region31: #{tpu_custom_call.1} parent=15 // pred_region
          %p280 = scmp.lt.s32.totalorder %s24, 1
          %s281 = scalar_select %p280, %s24, 1
          %s282 = smul.addr %s281, 4
          %s283 = smul.addr %s282, 4
          %s284 = scalar_lea.vmem %s3, %s283
        $region32: #{tpu_custom_call.1} parent=15 // pred_fallthru
          _
        // Predicated region
        $region33: #{tpu_custom_call.1} parent=15 // pred_check
          %p285 = pneg %p152
        $region34: #{tpu_custom_call.1} parent=15 // pred_check_branch
          %287 = sbr.rel (%p285) target = $region36
        $region35: #{tpu_custom_call.1} parent=15 // pred_region
          %p288 = scmp.lt.s32.totalorder %s24, 1
          %s289 = scalar_select %p288, %s24, 1
          %s290 = smul.addr %s289, 4
          %s291 = smul.addr %s290, 4
          %s292 = scalar_lea.vmem %s4, %s291
        $region36: #{tpu_custom_call.1} parent=15 // pred_fallthru
          _
        // Predicated region
        $region37: #{tpu_custom_call.1} parent=15 // pred_check
          %p293 = pneg %p178
        $region38: #{tpu_custom_call.1} parent=15 // pred_check_branch
          %295 = sbr.rel (%p293) target = $region40
        $region39: #{tpu_custom_call.1} parent=15 // pred_region
          %p296 = scmp.lt.s32.totalorder %s24, 1
          %s297 = scalar_select %p296, %s24, 1
          %s298 = smul.addr %s297, 8
          %s299 = smul.addr %s298, 4
          %s300 = scalar_lea.vmem %s5, %s299
        $region40: #{tpu_custom_call.1} parent=15 // pred_fallthru
          _
        // Predicated region
        $region41: #{tpu_custom_call.1} parent=15 // pred_check
          %p301 = pneg %p204
        $region42: #{tpu_custom_call.1} parent=15 // pred_check_branch
          %303 = sbr.rel (%p301) target = $region44
        $region43: #{tpu_custom_call.1} parent=15 // pred_region
          %p304 = scmp.lt.s32.totalorder %s24, 1
          %s305 = scalar_select %p304, %s24, 1
          %s306 = smul.addr %s305, 8
          %s307 = scalar_lea.vmem %s6, %s306
        $region44: #{tpu_custom_call.1} parent=15 // pred_fallthru
          _
      $region16: #{tpu_custom_call.1} parent=5 // pred_fallthru
        _
      %p308 = scmp.le.s32.totalorder 1, %s16
      %p309 = scmp.lt.s32.totalorder %s16, 5
      %p310 = pnand %p308, %p309
      %p311 = pneg %p310
      // Predicated region
      $region45: #{tpu_custom_call.1} parent=5 // pred_check
        _
      $region46: #{tpu_custom_call.1} parent=5 // pred_check_branch
        %313 = sbr.rel (%p310) target = $region48
      $region47: #{tpu_custom_call.1} parent=5 // pred_region
        %s314 = ssub.s32 %s16, 1
        %p315 = scmp.lt.s32.totalorder %s25, 1
        %s316 = scalar_select %p315, %s25, 1
        %s317 = smul.addr %s316, 8
        %s318 = scalar_lea.vmem %s0, %s317
        %p319 = pneg %p54
        %p320 = pneg %p51
        %p321 = scmp.lt.s32.totalorder %s26, 1
        %s322 = scalar_select %p321, %s26, 1
        %s323 = smul.addr %s322, 48
        %s324 = smul.addr %s323, 4
        %s325 = scalar_lea.vmem %s1, %s324
        %p326 = pneg %p80
        %p327 = pneg %p77
        %p328 = scmp.lt.s32.totalorder %s26, 1
        %s329 = scalar_select %p328, %s26, 1
        %s330 = smul.addr %s329, 12
        %s331 = scalar_lea.vmem %s2, %s330
        %p332 = pneg %p106
        %p333 = pneg %p103
        %p334 = scmp.lt.s32.totalorder %s26, 1
        %s335 = scalar_select %p334, %s26, 1
        %s336 = smul.addr %s335, 4
        %s337 = smul.addr %s336, 4
        %s338 = scalar_lea.vmem %s3, %s337
        %p339 = pneg %p132
        %p340 = pneg %p129
        %p341 = scmp.lt.s32.totalorder %s26, 1
        %s342 = scalar_select %p341, %s26, 1
        %s343 = smul.addr %s342, 4
        %s344 = smul.addr %s343, 4
        %s345 = scalar_lea.vmem %s4, %s344
        %p346 = pneg %p158
        %p347 = pneg %p155
        %p348 = scmp.lt.s32.totalorder %s26, 1
        %s349 = scalar_select %p348, %s26, 1
        %s350 = smul.addr %s349, 8
        %s351 = smul.addr %s350, 4
        %s352 = scalar_lea.vmem %s5, %s351
        %p353 = pneg %p184
        %p354 = pneg %p181
        %p355 = scmp.lt.s32.totalorder %s26, 1
        %s356 = scalar_select %p355, %s26, 1
        %s357 = smul.addr %s356, 8
        %s358 = scalar_lea.vmem %s6, %s357
        %p359 = pneg %p210
        %p360 = pneg %p207
        %p361 = pneg %p236
        %p362 = pneg %p233
        %s363 = sand.u32 %s223, 1
        %s364 = scalar_lea.sflag [#allocation3], %s363
        %s365 = sand.u32 %s223, 1
        %s366 = smul.addr %s365, 8
        %s367 = scalar_lea.vmem [#allocation2], %s366
        %p368 = scmp.lt.s32.totalorder %s25, 1
        %s369 = scalar_select %p368, %s25, 1
        %s370 = smul.addr %s369, 8
        %s371 = scalar_lea.vmem %s0, %s370
        %p372 = scmp.lt.s32.totalorder %s26, 1
        %s373 = scalar_select %p372, %s26, 1
        %s374 = smul.addr %s373, 48
        %s375 = smul.addr %s374, 4
        %s376 = scalar_lea.vmem %s1, %s375
        %p377 = scmp.lt.s32.totalorder %s26, 1
        %s378 = scalar_select %p377, %s26, 1
        %s379 = smul.addr %s378, 12
        %s380 = scalar_lea.vmem %s2, %s379
        %p381 = scmp.lt.s32.totalorder %s26, 1
        %s382 = scalar_select %p381, %s26, 1
        %s383 = smul.addr %s382, 4
        %s384 = smul.addr %s383, 4
        %s385 = scalar_lea.vmem %s3, %s384
        %p386 = scmp.lt.s32.totalorder %s26, 1
        %s387 = scalar_select %p386, %s26, 1
        %s388 = smul.addr %s387, 4
        %s389 = smul.addr %s388, 4
        %s390 = scalar_lea.vmem %s4, %s389
        %p391 = scmp.lt.s32.totalorder %s26, 1
        %s392 = scalar_select %p391, %s26, 1
        %s393 = smul.addr %s392, 8
        %s394 = smul.addr %s393, 4
        %s395 = scalar_lea.vmem %s5, %s394
        %p396 = scmp.lt.s32.totalorder %s26, 1
        %s397 = scalar_select %p396, %s26, 1
        %s398 = smul.addr %s397, 8
        %s399 = scalar_lea.vmem %s6, %s398
        %p401 = scmp.eq.s32.totalorder %s26, 0
        // Predicated region
        $region49: #{tpu_custom_call.1} parent=47 // pred_check
          %p402 = pneg %p401
        $region50: #{tpu_custom_call.1} parent=47 // pred_check_branch
          %404 = sbr.rel (%p402) target = $region52
        $region51: #{tpu_custom_call.1} parent=47 // pred_region
          %v405 = vld [vmem:[%s371] sm:$0xff]
          %vm406 = vcmask 261120
          %407 = vst.msk [vmem:[%s367] sm:$0xff] %vm406, %v405
        $region52: #{tpu_custom_call.1} parent=47 // pred_fallthru
          _
        %v408 = vld [vmem:[%s367] sm:$0xff]
        %v409 = vpack.c.bf16 %v408, %v408
        %v410 = vld [vmem:[%s399] sm:$0xff]
        %v411 = vld [vmem:[%s376] sm:$0xf]
        %v412 = vld [vmem:[%s376 + $0x4] sm:$0xf]
        %v413 = vld [vmem:[%s376 + $0x8] sm:$0xf]
        %v414 = vld [vmem:[%s376 + $0xc] sm:$0xf]
        %v415 = vld [vmem:[%s376 + $0x10] sm:$0xf]
        %v416 = vld [vmem:[%s376 + $0x14] sm:$0xf]
        %v417 = vld [vmem:[%s376 + $0x18] sm:$0xf]
        %v418 = vld [vmem:[%s376 + $0x1c] sm:$0xf]
        %v419 = vld [vmem:[%s376 + $0x20] sm:$0xf]
        %v420 = vld [vmem:[%s376 + $0x24] sm:$0xf]
        %v421 = vld [vmem:[%s376 + $0x28] sm:$0xf]
        %v422 = vld [vmem:[%s376 + $0x2c] sm:$0xf]
        %v423 = vld [vmem:[%s376 + $0x30] sm:$0xf]
        %v424 = vld [vmem:[%s376 + $0x34] sm:$0xf]
        %v425 = vld [vmem:[%s376 + $0x38] sm:$0xf]
        %v426 = vld [vmem:[%s376 + $0x3c] sm:$0xf]
        %v427 = vld [vmem:[%s376 + $0x40] sm:$0xf]
        %v428 = vld [vmem:[%s376 + $0x44] sm:$0xf]
        %v429 = vld [vmem:[%s376 + $0x48] sm:$0xf]
        %v430 = vld [vmem:[%s376 + $0x4c] sm:$0xf]
        %v431 = vld [vmem:[%s376 + $0x50] sm:$0xf]
        %v432 = vld [vmem:[%s376 + $0x54] sm:$0xf]
        %v433 = vld [vmem:[%s376 + $0x58] sm:$0xf]
        %v434 = vld [vmem:[%s376 + $0x5c] sm:$0xf]
        %v435 = vld [vmem:[%s376 + $0x60] sm:$0xf]
        %v436 = vld [vmem:[%s376 + $0x64] sm:$0xf]
        %v437 = vld [vmem:[%s376 + $0x68] sm:$0xf]
        %v438 = vld [vmem:[%s376 + $0x6c] sm:$0xf]
        %v439 = vld [vmem:[%s376 + $0x70] sm:$0xf]
        %v440 = vld [vmem:[%s376 + $0x74] sm:$0xf]
        %v441 = vld [vmem:[%s376 + $0x78] sm:$0xf]
        %v442 = vld [vmem:[%s376 + $0x7c] sm:$0xf]
        %v443 = vld [vmem:[%s376 + $0x80] sm:$0xf]
        %v444 = vld [vmem:[%s376 + $0x84] sm:$0xf]
        %v445 = vld [vmem:[%s376 + $0x88] sm:$0xf]
        %v446 = vld [vmem:[%s376 + $0x8c] sm:$0xf]
        %v447 = vld [vmem:[%s376 + $0x90] sm:$0xf]
        %v448 = vld [vmem:[%s376 + $0x94] sm:$0xf]
        %v449 = vld [vmem:[%s376 + $0x98] sm:$0xf]
        %v450 = vld [vmem:[%s376 + $0x9c] sm:$0xf]
        %v451 = vld [vmem:[%s376 + $0xa0] sm:$0xf]
        %v452 = vld [vmem:[%s376 + $0xa4] sm:$0xf]
        %v453 = vld [vmem:[%s376 + $0xa8] sm:$0xf]
        %v454 = vld [vmem:[%s376 + $0xac] sm:$0xf]
        %v455 = vld [vmem:[%s376 + $0xb0] sm:$0xf]
        %v456 = vld [vmem:[%s376 + $0xb4] sm:$0xf]
        %v457 = vld [vmem:[%s376 + $0xb8] sm:$0xf]
        %v458 = vld [vmem:[%s376 + $0xbc] sm:$0xf]
        %v459 = vld [vmem:[%s380] sm:$0x1]
        %v460 = vld [vmem:[%s380 + $0x1] sm:$0x1]
        %v461 = vld [vmem:[%s380 + $0x2] sm:$0x1]
        %v462 = vld [vmem:[%s380 + $0x3] sm:$0x1]
        %v463 = vld [vmem:[%s380 + $0x4] sm:$0x1]
        %v464 = vld [vmem:[%s380 + $0x5] sm:$0x1]
        %v465 = vld [vmem:[%s380 + $0x6] sm:$0x1]
        %v466 = vld [vmem:[%s380 + $0x7] sm:$0x1]
        %v467 = vld [vmem:[%s380 + $0x8] sm:$0x1]
        %v468 = vld [vmem:[%s380 + $0x9] sm:$0x1]
        %v469 = vld [vmem:[%s380 + $0xa] sm:$0x1]
        %v470 = vld [vmem:[%s380 + $0xb] sm:$0x1]
        %v483 = vlaneseq
        %v484 = vshrl.u32 %v483, 7
        %v485 = vsub.s32 0, %v484
        %v486 = vrot.slane %v459, %v485
        %v487 = vlaneseq
        %v488 = vshrl.u32 %v487, 7
        %v489 = vsub.s32 0, %v488
        %v490 = vrot.slane %v460, %v489
        %v491 = vlaneseq
        %v492 = vshrl.u32 %v491, 7
        %v493 = vsub.s32 0, %v492
        %v494 = vrot.slane %v461, %v493
        %v495 = vlaneseq
        %v496 = vshrl.u32 %v495, 7
        %v497 = vsub.s32 0, %v496
        %v498 = vrot.slane %v462, %v497
        %v499 = vlaneseq
        %v500 = vshrl.u32 %v499, 7
        %v501 = vsub.s32 0, %v500
        %v502 = vrot.slane %v463, %v501
        %v503 = vlaneseq
        %v504 = vshrl.u32 %v503, 7
        %v505 = vsub.s32 0, %v504
        %v506 = vrot.slane %v464, %v505
        %v507 = vlaneseq
        %v508 = vshrl.u32 %v507, 7
        %v509 = vsub.s32 0, %v508
        %v510 = vrot.slane %v465, %v509
        %v511 = vlaneseq
        %v512 = vshrl.u32 %v511, 7
        %v513 = vsub.s32 0, %v512
        %v514 = vrot.slane %v466, %v513
        %v515 = vlaneseq
        %v516 = vshrl.u32 %v515, 7
        %v517 = vsub.s32 0, %v516
        %v518 = vrot.slane %v467, %v517
        %v519 = vlaneseq
        %v520 = vshrl.u32 %v519, 7
        %v521 = vsub.s32 0, %v520
        %v522 = vrot.slane %v468, %v521
        %v523 = vlaneseq
        %v524 = vshrl.u32 %v523, 7
        %v525 = vsub.s32 0, %v524
        %v526 = vrot.slane %v469, %v525
        %v527 = vlaneseq
        %v528 = vshrl.u32 %v527, 7
        %v529 = vsub.s32 0, %v528
        %v530 = vrot.slane %v470, %v529
        %v547 = vunpack.c.l.b16 %v411
        %v548 = vunpack.c.l.b16 %v412
        %v549 = vunpack.c.l.b16 %v413
        %v550 = vunpack.c.l.b16 %v414
        %v551 = vpack.c.b16 %v548, %v547
        %v552 = vpack.c.b16 %v550, %v549
        %vm555 = vcmask 261120
        %v557 = vsel %vm555, %v409, 0
        %559 = vmatprep.subr.bf16.mxu0 0
        %560 = vmatpush1.bf16.msra.mxu0 %v551
        %561 = vmatprep.subr.bf16.mxu0 0
        %562 = vmatpush1.bf16.msra.mxu0 %v552
        %563 = vmatprep.subr.bf16.mxu0 0
        %564 = vmatpush1.bf16.msra.mxu0 0
        %565 = vmatprep.subr.bf16.mxu0 0
        %566 = vmatpush1.bf16.msra.mxu0 0
        %567 = vmatprep.subr.bf16.mxu0 0
        %568 = vmatpush1.bf16.msra.mxu0 0
        %569 = vmatprep.subr.bf16.mxu0 0
        %570 = vmatpush1.bf16.msra.mxu0 0
        %571 = vmatprep.subr.bf16.mxu0 0
        %572 = vmatpush1.bf16.msra.mxu0 0
        %573 = vmatprep.subr.bf16.mxu0 0
        %574 = vmatpush1.bf16.msra.mxu0 0
        %575 = vmatprep.subr.bf16.mxu0 0
        %576 = vmatpush1.bf16.msra.mxu0 0
        %577 = vmatprep.subr.bf16.mxu0 0
        %578 = vmatpush1.bf16.msra.mxu0 0
        %579 = vmatprep.subr.bf16.mxu0 0
        %580 = vmatpush1.bf16.msra.mxu0 0
        %581 = vmatprep.subr.bf16.mxu0 0
        %582 = vmatpush1.bf16.msra.mxu0 0
        %583 = vmatprep.subr.bf16.mxu0 0
        %584 = vmatpush1.bf16.msra.mxu0 0
        %585 = vmatprep.subr.bf16.mxu0 0
        %586 = vmatpush1.bf16.msra.mxu0 0
        %587 = vmatprep.subr.bf16.mxu0 0
        %588 = vmatpush1.bf16.msra.mxu0 0
        %589 = vmatprep.subr.bf16.mxu0 0
        %590 = vmatpush1.bf16.msra.mxu0 0
        %591 = vmatprep.mubr.bf16.mxu0 0
        %592 = vmatmul.mubr.bf16.gmra.mrb[0].mxu0 %v557
        %v593 = vpop.f32.mrb[0].mxu0
        %v594 = vadd.f32 %v486, %v593
        %v595 = vpop.f32.mrb[0].mxu0
        %v596 = vpop.f32.mrb[0].mxu0
        %v597 = vpop.f32.mrb[0].mxu0
        %598 = vdwg.mxu0
        %v603 = vunpack.c.l.b16 %v415
        %v604 = vunpack.c.l.b16 %v416
        %v605 = vunpack.c.l.b16 %v417
        %v606 = vunpack.c.l.b16 %v418
        %v607 = vpack.c.b16 %v604, %v603
        %v608 = vpack.c.b16 %v606, %v605
        %611 = vmatprep.subr.bf16.mxu0 0
        %612 = vmatpush1.bf16.msra.mxu0 %v607
        %613 = vmatprep.subr.bf16.mxu0 0
        %614 = vmatpush1.bf16.msra.mxu0 %v608
        %615 = vmatprep.subr.bf16.mxu0 0
        %616 = vmatpush1.bf16.msra.mxu0 0
        %617 = vmatprep.subr.bf16.mxu0 0
        %618 = vmatpush1.bf16.msra.mxu0 0
        %619 = vmatprep.subr.bf16.mxu0 0
        %620 = vmatpush1.bf16.msra.mxu0 0
        %621 = vmatprep.subr.bf16.mxu0 0
        %622 = vmatpush1.bf16.msra.mxu0 0
        %623 = vmatprep.subr.bf16.mxu0 0
        %624 = vmatpush1.bf16.msra.mxu0 0
        %625 = vmatprep.subr.bf16.mxu0 0
        %626 = vmatpush1.bf16.msra.mxu0 0
        %627 = vmatprep.subr.bf16.mxu0 0
        %628 = vmatpush1.bf16.msra.mxu0 0
        %629 = vmatprep.subr.bf16.mxu0 0
        %630 = vmatpush1.bf16.msra.mxu0 0
        %631 = vmatprep.subr.bf16.mxu0 0
        %632 = vmatpush1.bf16.msra.mxu0 0
        %633 = vmatprep.subr.bf16.mxu0 0
        %634 = vmatpush1.bf16.msra.mxu0 0
        %635 = vmatprep.subr.bf16.mxu0 0
        %636 = vmatpush1.bf16.msra.mxu0 0
        %637 = vmatprep.subr.bf16.mxu0 0
        %638 = vmatpush1.bf16.msra.mxu0 0
        %639 = vmatprep.subr.bf16.mxu0 0
        %640 = vmatpush1.bf16.msra.mxu0 0
        %641 = vmatprep.subr.bf16.mxu0 0
        %642 = vmatpush1.bf16.msra.mxu0 0
        %643 = vmatprep.mubr.bf16.mxu0 0
        %644 = vmatmul.mubr.bf16.gmra.mrb[0].mxu0 %v557
        %v645 = vpop.f32.mrb[0].mxu0
        %v646 = vadd.f32 %v490, %v645
        %v647 = vpop.f32.mrb[0].mxu0
        %v648 = vpop.f32.mrb[0].mxu0
        %v649 = vpop.f32.mrb[0].mxu0
        %650 = vdwg.mxu0
        %v655 = vunpack.c.l.b16 %v419
        %v656 = vunpack.c.l.b16 %v420
        %v657 = vunpack.c.l.b16 %v421
        %v658 = vunpack.c.l.b16 %v422
        %v659 = vpack.c.b16 %v656, %v655
        %v660 = vpack.c.b16 %v658, %v657
        %663 = vmatprep.subr.bf16.mxu0 0
        %664 = vmatpush1.bf16.msra.mxu0 %v659
        %665 = vmatprep.subr.bf16.mxu0 0
        %666 = vmatpush1.bf16.msra.mxu0 %v660
        %667 = vmatprep.subr.bf16.mxu0 0
        %668 = vmatpush1.bf16.msra.mxu0 0
        %669 = vmatprep.subr.bf16.mxu0 0
        %670 = vmatpush1.bf16.msra.mxu0 0
        %671 = vmatprep.subr.bf16.mxu0 0
        %672 = vmatpush1.bf16.msra.mxu0 0
        %673 = vmatprep.subr.bf16.mxu0 0
        %674 = vmatpush1.bf16.msra.mxu0 0
        %675 = vmatprep.subr.bf16.mxu0 0
        %676 = vmatpush1.bf16.msra.mxu0 0
        %677 = vmatprep.subr.bf16.mxu0 0
        %678 = vmatpush1.bf16.msra.mxu0 0
        %679 = vmatprep.subr.bf16.mxu0 0
        %680 = vmatpush1.bf16.msra.mxu0 0
        %681 = vmatprep.subr.bf16.mxu0 0
        %682 = vmatpush1.bf16.msra.mxu0 0
        %683 = vmatprep.subr.bf16.mxu0 0
        %684 = vmatpush1.bf16.msra.mxu0 0
        %685 = vmatprep.subr.bf16.mxu0 0
        %686 = vmatpush1.bf16.msra.mxu0 0
        %687 = vmatprep.subr.bf16.mxu0 0
        %688 = vmatpush1.bf16.msra.mxu0 0
        %689 = vmatprep.subr.bf16.mxu0 0
        %690 = vmatpush1.bf16.msra.mxu0 0
        %691 = vmatprep.subr.bf16.mxu0 0
        %692 = vmatpush1.bf16.msra.mxu0 0
        %693 = vmatprep.subr.bf16.mxu0 0
        %694 = vmatpush1.bf16.msra.mxu0 0
        %695 = vmatprep.mubr.bf16.mxu0 0
        %696 = vmatmul.mubr.bf16.gmra.mrb[0].mxu0 %v557
        %v697 = vpop.f32.mrb[0].mxu0
        %v698 = vadd.f32 %v494, %v697
        %v699 = vpop.f32.mrb[0].mxu0
        %v700 = vpop.f32.mrb[0].mxu0
        %v701 = vpop.f32.mrb[0].mxu0
        %702 = vdwg.mxu0
        %v707 = vunpack.c.l.b16 %v423
        %v708 = vunpack.c.l.b16 %v424
        %v709 = vunpack.c.l.b16 %v425
        %v710 = vunpack.c.l.b16 %v426
        %v711 = vpack.c.b16 %v708, %v707
        %v712 = vpack.c.b16 %v710, %v709
        %715 = vmatprep.subr.bf16.mxu0 0
        %716 = vmatpush1.bf16.msra.mxu0 %v711
        %717 = vmatprep.subr.bf16.mxu0 0
        %718 = vmatpush1.bf16.msra.mxu0 %v712
        %719 = vmatprep.subr.bf16.mxu0 0
        %720 = vmatpush1.bf16.msra.mxu0 0
        %721 = vmatprep.subr.bf16.mxu0 0
        %722 = vmatpush1.bf16.msra.mxu0 0
        %723 = vmatprep.subr.bf16.mxu0 0
        %724 = vmatpush1.bf16.msra.mxu0 0
        %725 = vmatprep.subr.bf16.mxu0 0
        %726 = vmatpush1.bf16.msra.mxu0 0
        %727 = vmatprep.subr.bf16.mxu0 0
        %728 = vmatpush1.bf16.msra.mxu0 0
        %729 = vmatprep.subr.bf16.mxu0 0
        %730 = vmatpush1.bf16.msra.mxu0 0
        %731 = vmatprep.subr.bf16.mxu0 0
        %732 = vmatpush1.bf16.msra.mxu0 0
        %733 = vmatprep.subr.bf16.mxu0 0
        %734 = vmatpush1.bf16.msra.mxu0 0
        %735 = vmatprep.subr.bf16.mxu0 0
        %736 = vmatpush1.bf16.msra.mxu0 0
        %737 = vmatprep.subr.bf16.mxu0 0
        %738 = vmatpush1.bf16.msra.mxu0 0
        %739 = vmatprep.subr.bf16.mxu0 0
        %740 = vmatpush1.bf16.msra.mxu0 0
        %741 = vmatprep.subr.bf16.mxu0 0
        %742 = vmatpush1.bf16.msra.mxu0 0
        %743 = vmatprep.subr.bf16.mxu0 0
        %744 = vmatpush1.bf16.msra.mxu0 0
        %745 = vmatprep.subr.bf16.mxu0 0
        %746 = vmatpush1.bf16.msra.mxu0 0
        %747 = vmatprep.mubr.bf16.mxu0 0
        %748 = vmatmul.mubr.bf16.gmra.mrb[0].mxu0 %v557
        %v749 = vpop.f32.mrb[0].mxu0
        %v750 = vadd.f32 %v498, %v749
        %v751 = vpop.f32.mrb[0].mxu0
        %v752 = vpop.f32.mrb[0].mxu0
        %v753 = vpop.f32.mrb[0].mxu0
        %754 = vdwg.mxu0
        %v759 = vunpack.c.l.b16 %v427
        %v760 = vunpack.c.l.b16 %v428
        %v761 = vunpack.c.l.b16 %v429
        %v762 = vunpack.c.l.b16 %v430
        %v763 = vpack.c.b16 %v760, %v759
        %v764 = vpack.c.b16 %v762, %v761
        %767 = vmatprep.subr.bf16.mxu0 0
        %768 = vmatpush1.bf16.msra.mxu0 %v763
        %769 = vmatprep.subr.bf16.mxu0 0
        %770 = vmatpush1.bf16.msra.mxu0 %v764
        %771 = vmatprep.subr.bf16.mxu0 0
        %772 = vmatpush1.bf16.msra.mxu0 0
        %773 = vmatprep.subr.bf16.mxu0 0
        %774 = vmatpush1.bf16.msra.mxu0 0
        %775 = vmatprep.subr.bf16.mxu0 0
        %776 = vmatpush1.bf16.msra.mxu0 0
        %777 = vmatprep.subr.bf16.mxu0 0
        %778 = vmatpush1.bf16.msra.mxu0 0
        %779 = vmatprep.subr.bf16.mxu0 0
        %780 = vmatpush1.bf16.msra.mxu0 0
        %781 = vmatprep.subr.bf16.mxu0 0
        %782 = vmatpush1.bf16.msra.mxu0 0
        %783 = vmatprep.subr.bf16.mxu0 0
        %784 = vmatpush1.bf16.msra.mxu0 0
        %785 = vmatprep.subr.bf16.mxu0 0
        %786 = vmatpush1.bf16.msra.mxu0 0
        %787 = vmatprep.subr.bf16.mxu0 0
        %788 = vmatpush1.bf16.msra.mxu0 0
        %789 = vmatprep.subr.bf16.mxu0 0
        %790 = vmatpush1.bf16.msra.mxu0 0
        %791 = vmatprep.subr.bf16.mxu0 0
        %792 = vmatpush1.bf16.msra.mxu0 0
        %793 = vmatprep.subr.bf16.mxu0 0
        %794 = vmatpush1.bf16.msra.mxu0 0
        %795 = vmatprep.subr.bf16.mxu0 0
        %796 = vmatpush1.bf16.msra.mxu0 0
        %797 = vmatprep.subr.bf16.mxu0 0
        %798 = vmatpush1.bf16.msra.mxu0 0
        %799 = vmatprep.mubr.bf16.mxu0 0
        %800 = vmatmul.mubr.bf16.gmra.mrb[0].mxu0 %v557
        %v801 = vpop.f32.mrb[0].mxu0
        %v802 = vadd.f32 %v502, %v801
        %v803 = vpop.f32.mrb[0].mxu0
        %v804 = vpop.f32.mrb[0].mxu0
        %v805 = vpop.f32.mrb[0].mxu0
        %806 = vdwg.mxu0
        %v811 = vunpack.c.l.b16 %v431
        %v812 = vunpack.c.l.b16 %v432
        %v813 = vunpack.c.l.b16 %v433
        %v814 = vunpack.c.l.b16 %v434
        %v815 = vpack.c.b16 %v812, %v811
        %v816 = vpack.c.b16 %v814, %v813
        %819 = vmatprep.subr.bf16.mxu0 0
        %820 = vmatpush1.bf16.msra.mxu0 %v815
        %821 = vmatprep.subr.bf16.mxu0 0
        %822 = vmatpush1.bf16.msra.mxu0 %v816
        %823 = vmatprep.subr.bf16.mxu0 0
        %824 = vmatpush1.bf16.msra.mxu0 0
        %825 = vmatprep.subr.bf16.mxu0 0
        %826 = vmatpush1.bf16.msra.mxu0 0
        %827 = vmatprep.subr.bf16.mxu0 0
        %828 = vmatpush1.bf16.msra.mxu0 0
        %829 = vmatprep.subr.bf16.mxu0 0
        %830 = vmatpush1.bf16.msra.mxu0 0
        %831 = vmatprep.subr.bf16.mxu0 0
        %832 = vmatpush1.bf16.msra.mxu0 0
        %833 = vmatprep.subr.bf16.mxu0 0
        %834 = vmatpush1.bf16.msra.mxu0 0
        %835 = vmatprep.subr.bf16.mxu0 0
        %836 = vmatpush1.bf16.msra.mxu0 0
        %837 = vmatprep.subr.bf16.mxu0 0
        %838 = vmatpush1.bf16.msra.mxu0 0
        %839 = vmatprep.subr.bf16.mxu0 0
        %840 = vmatpush1.bf16.msra.mxu0 0
        %841 = vmatprep.subr.bf16.mxu0 0
        %842 = vmatpush1.bf16.msra.mxu0 0
        %843 = vmatprep.subr.bf16.mxu0 0
        %844 = vmatpush1.bf16.msra.mxu0 0
        %845 = vmatprep.subr.bf16.mxu0 0
        %846 = vmatpush1.bf16.msra.mxu0 0
        %847 = vmatprep.subr.bf16.mxu0 0
        %848 = vmatpush1.bf16.msra.mxu0 0
        %849 = vmatprep.subr.bf16.mxu0 0
        %850 = vmatpush1.bf16.msra.mxu0 0
        %851 = vmatprep.mubr.bf16.mxu0 0
        %852 = vmatmul.mubr.bf16.gmra.mrb[0].mxu0 %v557
        %v853 = vpop.f32.mrb[0].mxu0
        %v854 = vadd.f32 %v506, %v853
        %v855 = vpop.f32.mrb[0].mxu0
        %v856 = vpop.f32.mrb[0].mxu0
        %v857 = vpop.f32.mrb[0].mxu0
        %858 = vdwg.mxu0
        %v863 = vunpack.c.l.b16 %v435
        %v864 = vunpack.c.l.b16 %v436
        %v865 = vunpack.c.l.b16 %v437
        %v866 = vunpack.c.l.b16 %v438
        %v867 = vpack.c.b16 %v864, %v863
        %v868 = vpack.c.b16 %v866, %v865
        %871 = vmatprep.subr.bf16.mxu0 0
        %872 = vmatpush1.bf16.msra.mxu0 %v867
        %873 = vmatprep.subr.bf16.mxu0 0
        %874 = vmatpush1.bf16.msra.mxu0 %v868
        %875 = vmatprep.subr.bf16.mxu0 0
        %876 = vmatpush1.bf16.msra.mxu0 0
        %877 = vmatprep.subr.bf16.mxu0 0
        %878 = vmatpush1.bf16.msra.mxu0 0
        %879 = vmatprep.subr.bf16.mxu0 0
        %880 = vmatpush1.bf16.msra.mxu0 0
        %881 = vmatprep.subr.bf16.mxu0 0
        %882 = vmatpush1.bf16.msra.mxu0 0
        %883 = vmatprep.subr.bf16.mxu0 0
        %884 = vmatpush1.bf16.msra.mxu0 0
        %885 = vmatprep.subr.bf16.mxu0 0
        %886 = vmatpush1.bf16.msra.mxu0 0
        %887 = vmatprep.subr.bf16.mxu0 0
        %888 = vmatpush1.bf16.msra.mxu0 0
        %889 = vmatprep.subr.bf16.mxu0 0
        %890 = vmatpush1.bf16.msra.mxu0 0
        %891 = vmatprep.subr.bf16.mxu0 0
        %892 = vmatpush1.bf16.msra.mxu0 0
        %893 = vmatprep.subr.bf16.mxu0 0
        %894 = vmatpush1.bf16.msra.mxu0 0
        %895 = vmatprep.subr.bf16.mxu0 0
        %896 = vmatpush1.bf16.msra.mxu0 0
        %897 = vmatprep.subr.bf16.mxu0 0
        %898 = vmatpush1.bf16.msra.mxu0 0
        %899 = vmatprep.subr.bf16.mxu0 0
        %900 = vmatpush1.bf16.msra.mxu0 0
        %901 = vmatprep.subr.bf16.mxu0 0
        %902 = vmatpush1.bf16.msra.mxu0 0
        %903 = vmatprep.mubr.bf16.mxu0 0
        %904 = vmatmul.mubr.bf16.gmra.mrb[0].mxu0 %v557
        %v905 = vpop.f32.mrb[0].mxu0
        %v906 = vadd.f32 %v510, %v905
        %v907 = vpop.f32.mrb[0].mxu0
        %v908 = vpop.f32.mrb[0].mxu0
        %v909 = vpop.f32.mrb[0].mxu0
        %910 = vdwg.mxu0
        %v915 = vunpack.c.l.b16 %v439
        %v916 = vunpack.c.l.b16 %v440
        %v917 = vunpack.c.l.b16 %v441
        %v918 = vunpack.c.l.b16 %v442
        %v919 = vpack.c.b16 %v916, %v915
        %v920 = vpack.c.b16 %v918, %v917
        %923 = vmatprep.subr.bf16.mxu0 0
        %924 = vmatpush1.bf16.msra.mxu0 %v919
        %925 = vmatprep.subr.bf16.mxu0 0
        %926 = vmatpush1.bf16.msra.mxu0 %v920
        %927 = vmatprep.subr.bf16.mxu0 0
        %928 = vmatpush1.bf16.msra.mxu0 0
        %929 = vmatprep.subr.bf16.mxu0 0
        %930 = vmatpush1.bf16.msra.mxu0 0
        %931 = vmatprep.subr.bf16.mxu0 0
        %932 = vmatpush1.bf16.msra.mxu0 0
        %933 = vmatprep.subr.bf16.mxu0 0
        %934 = vmatpush1.bf16.msra.mxu0 0
        %935 = vmatprep.subr.bf16.mxu0 0
        %936 = vmatpush1.bf16.msra.mxu0 0
        %937 = vmatprep.subr.bf16.mxu0 0
        %938 = vmatpush1.bf16.msra.mxu0 0
        %939 = vmatprep.subr.bf16.mxu0 0
        %940 = vmatpush1.bf16.msra.mxu0 0
        %941 = vmatprep.subr.bf16.mxu0 0
        %942 = vmatpush1.bf16.msra.mxu0 0
        %943 = vmatprep.subr.bf16.mxu0 0
        %944 = vmatpush1.bf16.msra.mxu0 0
        %945 = vmatprep.subr.bf16.mxu0 0
        %946 = vmatpush1.bf16.msra.mxu0 0
        %947 = vmatprep.subr.bf16.mxu0 0
        %948 = vmatpush1.bf16.msra.mxu0 0
        %949 = vmatprep.subr.bf16.mxu0 0
        %950 = vmatpush1.bf16.msra.mxu0 0
        %951 = vmatprep.subr.bf16.mxu0 0
        %952 = vmatpush1.bf16.msra.mxu0 0
        %953 = vmatprep.subr.bf16.mxu0 0
        %954 = vmatpush1.bf16.msra.mxu0 0
        %955 = vmatprep.mubr.bf16.mxu0 0
        %956 = vmatmul.mubr.bf16.gmra.mrb[0].mxu0 %v557
        %v957 = vpop.f32.mrb[0].mxu0
        %v958 = vadd.f32 %v514, %v957
        %v959 = vpop.f32.mrb[0].mxu0
        %v960 = vpop.f32.mrb[0].mxu0
        %v961 = vpop.f32.mrb[0].mxu0
        %962 = vdwg.mxu0
        %v967 = vunpack.c.l.b16 %v443
        %v968 = vunpack.c.l.b16 %v444
        %v969 = vunpack.c.l.b16 %v445
        %v970 = vunpack.c.l.b16 %v446
        %v971 = vpack.c.b16 %v968, %v967
        %v972 = vpack.c.b16 %v970, %v969
        %975 = vmatprep.subr.bf16.mxu0 0
        %976 = vmatpush1.bf16.msra.mxu0 %v971
        %977 = vmatprep.subr.bf16.mxu0 0
        %978 = vmatpush1.bf16.msra.mxu0 %v972
        %979 = vmatprep.subr.bf16.mxu0 0
        %980 = vmatpush1.bf16.msra.mxu0 0
        %981 = vmatprep.subr.bf16.mxu0 0
        %982 = vmatpush1.bf16.msra.mxu0 0
        %983 = vmatprep.subr.bf16.mxu0 0
        %984 = vmatpush1.bf16.msra.mxu0 0
        %985 = vmatprep.subr.bf16.mxu0 0
        %986 = vmatpush1.bf16.msra.mxu0 0
        %987 = vmatprep.subr.bf16.mxu0 0
        %988 = vmatpush1.bf16.msra.mxu0 0
        %989 = vmatprep.subr.bf16.mxu0 0
        %990 = vmatpush1.bf16.msra.mxu0 0
        %991 = vmatprep.subr.bf16.mxu0 0
        %992 = vmatpush1.bf16.msra.mxu0 0
        %993 = vmatprep.subr.bf16.mxu0 0
        %994 = vmatpush1.bf16.msra.mxu0 0
        %995 = vmatprep.subr.bf16.mxu0 0
        %996 = vmatpush1.bf16.msra.mxu0 0
        %997 = vmatprep.subr.bf16.mxu0 0
        %998 = vmatpush1.bf16.msra.mxu0 0
        %999 = vmatprep.subr.bf16.mxu0 0
        %1000 = vmatpush1.bf16.msra.mxu0 0
        %1001 = vmatprep.subr.bf16.mxu0 0
        %1002 = vmatpush1.bf16.msra.mxu0 0
        %1003 = vmatprep.subr.bf16.mxu0 0
        %1004 = vmatpush1.bf16.msra.mxu0 0
        %1005 = vmatprep.subr.bf16.mxu0 0
        %1006 = vmatpush1.bf16.msra.mxu0 0
        %1007 = vmatprep.mubr.bf16.mxu0 0
        %1008 = vmatmul.mubr.bf16.gmra.mrb[0].mxu0 %v557
        %v1009 = vpop.f32.mrb[0].mxu0
        %v1010 = vadd.f32 %v518, %v1009
        %v1011 = vpop.f32.mrb[0].mxu0
        %v1012 = vpop.f32.mrb[0].mxu0
        %v1013 = vpop.f32.mrb[0].mxu0
        %1014 = vdwg.mxu0
        %v1019 = vunpack.c.l.b16 %v447
        %v1020 = vunpack.c.l.b16 %v448
        %v1021 = vunpack.c.l.b16 %v449
        %v1022 = vunpack.c.l.b16 %v450
        %v1023 = vpack.c.b16 %v1020, %v1019
        %v1024 = vpack.c.b16 %v1022, %v1021
        %1027 = vmatprep.subr.bf16.mxu0 0
        %1028 = vmatpush1.bf16.msra.mxu0 %v1023
        %1029 = vmatprep.subr.bf16.mxu0 0
        %1030 = vmatpush1.bf16.msra.mxu0 %v1024
        %1031 = vmatprep.subr.bf16.mxu0 0
        %1032 = vmatpush1.bf16.msra.mxu0 0
        %1033 = vmatprep.subr.bf16.mxu0 0
        %1034 = vmatpush1.bf16.msra.mxu0 0
        %1035 = vmatprep.subr.bf16.mxu0 0
        %1036 = vmatpush1.bf16.msra.mxu0 0
        %1037 = vmatprep.subr.bf16.mxu0 0
        %1038 = vmatpush1.bf16.msra.mxu0 0
        %1039 = vmatprep.subr.bf16.mxu0 0
        %1040 = vmatpush1.bf16.msra.mxu0 0
        %1041 = vmatprep.subr.bf16.mxu0 0
        %1042 = vmatpush1.bf16.msra.mxu0 0
        %1043 = vmatprep.subr.bf16.mxu0 0
        %1044 = vmatpush1.bf16.msra.mxu0 0
        %1045 = vmatprep.subr.bf16.mxu0 0
        %1046 = vmatpush1.bf16.msra.mxu0 0
        %1047 = vmatprep.subr.bf16.mxu0 0
        %1048 = vmatpush1.bf16.msra.mxu0 0
        %1049 = vmatprep.subr.bf16.mxu0 0
        %1050 = vmatpush1.bf16.msra.mxu0 0
        %1051 = vmatprep.subr.bf16.mxu0 0
        %1052 = vmatpush1.bf16.msra.mxu0 0
        %1053 = vmatprep.subr.bf16.mxu0 0
        %1054 = vmatpush1.bf16.msra.mxu0 0
        %1055 = vmatprep.subr.bf16.mxu0 0
        %1056 = vmatpush1.bf16.msra.mxu0 0
        %1057 = vmatprep.subr.bf16.mxu0 0
        %1058 = vmatpush1.bf16.msra.mxu0 0
        %1059 = vmatprep.mubr.bf16.mxu0 0
        %1060 = vmatmul.mubr.bf16.gmra.mrb[0].mxu0 %v557
        %v1061 = vpop.f32.mrb[0].mxu0
        %v1062 = vadd.f32 %v522, %v1061
        %v1063 = vpop.f32.mrb[0].mxu0
        %v1064 = vpop.f32.mrb[0].mxu0
        %v1065 = vpop.f32.mrb[0].mxu0
        %1066 = vdwg.mxu0
        %v1071 = vunpack.c.l.b16 %v451
        %v1072 = vunpack.c.l.b16 %v452
        %v1073 = vunpack.c.l.b16 %v453
        %v1074 = vunpack.c.l.b16 %v454
        %v1075 = vpack.c.b16 %v1072, %v1071
        %v1076 = vpack.c.b16 %v1074, %v1073
        %1079 = vmatprep.subr.bf16.mxu0 0
        %1080 = vmatpush1.bf16.msra.mxu0 %v1075
        %1081 = vmatprep.subr.bf16.mxu0 0
        %1082 = vmatpush1.bf16.msra.mxu0 %v1076
        %1083 = vmatprep.subr.bf16.mxu0 0
        %1084 = vmatpush1.bf16.msra.mxu0 0
        %1085 = vmatprep.subr.bf16.mxu0 0
        %1086 = vmatpush1.bf16.msra.mxu0 0
        %1087 = vmatprep.subr.bf16.mxu0 0
        %1088 = vmatpush1.bf16.msra.mxu0 0
        %1089 = vmatprep.subr.bf16.mxu0 0
        %1090 = vmatpush1.bf16.msra.mxu0 0
        %1091 = vmatprep.subr.bf16.mxu0 0
        %1092 = vmatpush1.bf16.msra.mxu0 0
        %1093 = vmatprep.subr.bf16.mxu0 0
        %1094 = vmatpush1.bf16.msra.mxu0 0
        %1095 = vmatprep.subr.bf16.mxu0 0
        %1096 = vmatpush1.bf16.msra.mxu0 0
        %1097 = vmatprep.subr.bf16.mxu0 0
        %1098 = vmatpush1.bf16.msra.mxu0 0
        %1099 = vmatprep.subr.bf16.mxu0 0
        %1100 = vmatpush1.bf16.msra.mxu0 0
        %1101 = vmatprep.subr.bf16.mxu0 0
        %1102 = vmatpush1.bf16.msra.mxu0 0
        %1103 = vmatprep.subr.bf16.mxu0 0
        %1104 = vmatpush1.bf16.msra.mxu0 0
        %1105 = vmatprep.subr.bf16.mxu0 0
        %1106 = vmatpush1.bf16.msra.mxu0 0
        %1107 = vmatprep.subr.bf16.mxu0 0
        %1108 = vmatpush1.bf16.msra.mxu0 0
        %1109 = vmatprep.subr.bf16.mxu0 0
        %1110 = vmatpush1.bf16.msra.mxu0 0
        %1111 = vmatprep.mubr.bf16.mxu0 0
        %1112 = vmatmul.mubr.bf16.gmra.mrb[0].mxu0 %v557
        %v1113 = vpop.f32.mrb[0].mxu0
        %v1114 = vadd.f32 %v526, %v1113
        %v1115 = vpop.f32.mrb[0].mxu0
        %v1116 = vpop.f32.mrb[0].mxu0
        %v1117 = vpop.f32.mrb[0].mxu0
        %1118 = vdwg.mxu0
        %v1123 = vunpack.c.l.b16 %v455
        %v1124 = vunpack.c.l.b16 %v456
        %v1125 = vunpack.c.l.b16 %v457
        %v1126 = vunpack.c.l.b16 %v458
        %v1127 = vpack.c.b16 %v1124, %v1123
        %v1128 = vpack.c.b16 %v1126, %v1125
        %1131 = vmatprep.subr.bf16.mxu0 0
        %1132 = vmatpush1.bf16.msra.mxu0 %v1127
        %1133 = vmatprep.subr.bf16.mxu0 0
        %1134 = vmatpush1.bf16.msra.mxu0 %v1128
        %1135 = vmatprep.subr.bf16.mxu0 0
        %1136 = vmatpush1.bf16.msra.mxu0 0
        %1137 = vmatprep.subr.bf16.mxu0 0
        %1138 = vmatpush1.bf16.msra.mxu0 0
        %1139 = vmatprep.subr.bf16.mxu0 0
        %1140 = vmatpush1.bf16.msra.mxu0 0
        %1141 = vmatprep.subr.bf16.mxu0 0
        %1142 = vmatpush1.bf16.msra.mxu0 0
        %1143 = vmatprep.subr.bf16.mxu0 0
        %1144 = vmatpush1.bf16.msra.mxu0 0
        %1145 = vmatprep.subr.bf16.mxu0 0
        %1146 = vmatpush1.bf16.msra.mxu0 0
        %1147 = vmatprep.subr.bf16.mxu0 0
        %1148 = vmatpush1.bf16.msra.mxu0 0
        %1149 = vmatprep.subr.bf16.mxu0 0
        %1150 = vmatpush1.bf16.msra.mxu0 0
        %1151 = vmatprep.subr.bf16.mxu0 0
        %1152 = vmatpush1.bf16.msra.mxu0 0
        %1153 = vmatprep.subr.bf16.mxu0 0
        %1154 = vmatpush1.bf16.msra.mxu0 0
        %1155 = vmatprep.subr.bf16.mxu0 0
        %1156 = vmatpush1.bf16.msra.mxu0 0
        %1157 = vmatprep.subr.bf16.mxu0 0
        %1158 = vmatpush1.bf16.msra.mxu0 0
        %1159 = vmatprep.subr.bf16.mxu0 0
        %1160 = vmatpush1.bf16.msra.mxu0 0
        %1161 = vmatprep.subr.bf16.mxu0 0
        %1162 = vmatpush1.bf16.msra.mxu0 0
        %1163 = vmatprep.mubr.bf16.mxu0 0
        %1164 = vmatmul.mubr.bf16.gmra.mrb[0].mxu0 %v557
        %v1165 = vpop.f32.mrb[0].mxu0
        %v1166 = vadd.f32 %v530, %v1165
        %v1167 = vpop.f32.mrb[0].mxu0
        %v1168 = vpop.f32.mrb[0].mxu0
        %v1169 = vpop.f32.mrb[0].mxu0
        %1170 = vdwg.mxu0
        %v1171 = vpack.c.bf16 %v594, %v594
        %v1172 = vpack.c.bf16 %v646, %v646
        %v1173 = vpack.c.bf16 %v698, %v698
        %v1174 = vpack.c.bf16 %v750, %v750
        %v1175 = vpack.c.bf16 %v802, %v802
        %v1176 = vpack.c.bf16 %v854, %v854
        %v1177 = vpack.c.bf16 %v906, %v906
        %v1178 = vpack.c.bf16 %v958, %v958
        %v1179 = vpack.c.bf16 %v1010, %v1010
        %v1180 = vpack.c.bf16 %v1062, %v1062
        %v1181 = vpack.c.bf16 %v1114, %v1114
        %v1182 = vpack.c.bf16 %v1166, %v1166
        %vm1183 = vcmask 64512
        %v1185 = vsel %vm1183, %v1171, 0
        %v1188 = vsel %vm1183, %v1175, 0
        %1190 = vmatprep.subr.bf16.mxu0 0
        %1191 = vmatpush1.bf16.xpose.msra.mxu0 %v1188
        %1192 = vmatprep.subr.bf16.mxu0 0
        %1193 = vmatpush1.bf16.xpose.msra.mxu0 0
        %1194 = vmatprep.subr.bf16.mxu0 0
        %1195 = vmatpush1.bf16.xpose.msra.mxu0 0
        %1196 = vmatprep.subr.bf16.mxu0 0
        %1197 = vmatpush1.bf16.xpose.msra.mxu0 0
        %1198 = vmatprep.subr.bf16.mxu0 0
        %1199 = vmatpush1.bf16.xpose.msra.mxu0 0
        %1200 = vmatprep.subr.bf16.mxu0 0
        %1201 = vmatpush1.bf16.xpose.msra.mxu0 0
        %1202 = vmatprep.subr.bf16.mxu0 0
        %1203 = vmatpush1.bf16.xpose.msra.mxu0 0
        %1204 = vmatprep.subr.bf16.mxu0 0
        %1205 = vmatpush1.bf16.xpose.msra.mxu0 0
        %1206 = vmatprep.subr.bf16.mxu0 0
        %1207 = vmatpush1.bf16.xpose.msra.mxu0 0
        %1208 = vmatprep.subr.bf16.mxu0 0
        %1209 = vmatpush1.bf16.xpose.msra.mxu0 0
        %1210 = vmatprep.subr.bf16.mxu0 0
        %1211 = vmatpush1.bf16.xpose.msra.mxu0 0
        %1212 = vmatprep.subr.bf16.mxu0 0
        %1213 = vmatpush1.bf16.xpose.msra.mxu0 0
        %1214 = vmatprep.subr.bf16.mxu0 0
        %1215 = vmatpush1.bf16.xpose.msra.mxu0 0
        %1216 = vmatprep.subr.bf16.mxu0 0
        %1217 = vmatpush1.bf16.xpose.msra.mxu0 0
        %1218 = vmatprep.subr.bf16.mxu0 0
        %1219 = vmatpush1.bf16.xpose.msra.mxu0 0
        %1220 = vmatprep.subr.bf16.mxu0 0
        %1221 = vmatpush1.bf16.xpose.msra.mxu0 0
        %1222 = vmatprep.mubr.bf16.mxu0 0
        %1223 = vmatmul.mubr.bf16.gmra.mrb[0].mxu0 %v1185
        %v1224 = vpop.f32.mrb[0].mxu0
        %v1225 = vadd.f32 0.0, %v1224
        %v1226 = vpop.f32.mrb[0].mxu0
        %v1227 = vpop.f32.mrb[0].mxu0
        %v1228 = vpop.f32.mrb[0].mxu0
        %1229 = vdwg.mxu0
        %v1231 = vsel %vm1183, %v1172, 0
        %v1234 = vsel %vm1183, %v1176, 0
        %1236 = vmatprep.subr.bf16.mxu0 0
        %1237 = vmatpush1.bf16.xpose.msra.mxu0 %v1234
        %1238 = vmatprep.subr.bf16.mxu0 0
        %1239 = vmatpush1.bf16.xpose.msra.mxu0 0
        %1240 = vmatprep.subr.bf16.mxu0 0
        %1241 = vmatpush1.bf16.xpose.msra.mxu0 0
        %1242 = vmatprep.subr.bf16.mxu0 0
        %1243 = vmatpush1.bf16.xpose.msra.mxu0 0
        %1244 = vmatprep.subr.bf16.mxu0 0
        %1245 = vmatpush1.bf16.xpose.msra.mxu0 0
        %1246 = vmatprep.subr.bf16.mxu0 0
        %1247 = vmatpush1.bf16.xpose.msra.mxu0 0
        %1248 = vmatprep.subr.bf16.mxu0 0
        %1249 = vmatpush1.bf16.xpose.msra.mxu0 0
        %1250 = vmatprep.subr.bf16.mxu0 0
        %1251 = vmatpush1.bf16.xpose.msra.mxu0 0
        %1252 = vmatprep.subr.bf16.mxu0 0
        %1253 = vmatpush1.bf16.xpose.msra.mxu0 0
        %1254 = vmatprep.subr.bf16.mxu0 0
        %1255 = vmatpush1.bf16.xpose.msra.mxu0 0
        %1256 = vmatprep.subr.bf16.mxu0 0
        %1257 = vmatpush1.bf16.xpose.msra.mxu0 0
        %1258 = vmatprep.subr.bf16.mxu0 0
        %1259 = vmatpush1.bf16.xpose.msra.mxu0 0
        %1260 = vmatprep.subr.bf16.mxu0 0
        %1261 = vmatpush1.bf16.xpose.msra.mxu0 0
        %1262 = vmatprep.subr.bf16.mxu0 0
        %1263 = vmatpush1.bf16.xpose.msra.mxu0 0
        %1264 = vmatprep.subr.bf16.mxu0 0
        %1265 = vmatpush1.bf16.xpose.msra.mxu0 0
        %1266 = vmatprep.subr.bf16.mxu0 0
        %1267 = vmatpush1.bf16.xpose.msra.mxu0 0
        %1268 = vmatprep.mubr.bf16.mxu0 0
        %1269 = vmatmul.mubr.bf16.gmra.mrb[0].mxu0 %v1231
        %v1270 = vpop.f32.mrb[0].mxu0
        %v1271 = vadd.f32 0.0, %v1270
        %v1272 = vpop.f32.mrb[0].mxu0
        %v1273 = vpop.f32.mrb[0].mxu0
        %v1274 = vpop.f32.mrb[0].mxu0
        %1275 = vdwg.mxu0
        %v1277 = vsel %vm1183, %v1173, 0
        %v1280 = vsel %vm1183, %v1177, 0
        %1282 = vmatprep.subr.bf16.mxu0 0
        %1283 = vmatpush1.bf16.xpose.msra.mxu0 %v1280
        %1284 = vmatprep.subr.bf16.mxu0 0
        %1285 = vmatpush1.bf16.xpose.msra.mxu0 0
        %1286 = vmatprep.subr.bf16.mxu0 0
        %1287 = vmatpush1.bf16.xpose.msra.mxu0 0
        %1288 = vmatprep.subr.bf16.mxu0 0
        %1289 = vmatpush1.bf16.xpose.msra.mxu0 0
        %1290 = vmatprep.subr.bf16.mxu0 0
        %1291 = vmatpush1.bf16.xpose.msra.mxu0 0
        %1292 = vmatprep.subr.bf16.mxu0 0
        %1293 = vmatpush1.bf16.xpose.msra.mxu0 0
        %1294 = vmatprep.subr.bf16.mxu0 0
        %1295 = vmatpush1.bf16.xpose.msra.mxu0 0
        %1296 = vmatprep.subr.bf16.mxu0 0
        %1297 = vmatpush1.bf16.xpose.msra.mxu0 0
        %1298 = vmatprep.subr.bf16.mxu0 0
        %1299 = vmatpush1.bf16.xpose.msra.mxu0 0
        %1300 = vmatprep.subr.bf16.mxu0 0
        %1301 = vmatpush1.bf16.xpose.msra.mxu0 0
        %1302 = vmatprep.subr.bf16.mxu0 0
        %1303 = vmatpush1.bf16.xpose.msra.mxu0 0
        %1304 = vmatprep.subr.bf16.mxu0 0
        %1305 = vmatpush1.bf16.xpose.msra.mxu0 0
        %1306 = vmatprep.subr.bf16.mxu0 0
        %1307 = vmatpush1.bf16.xpose.msra.mxu0 0
        %1308 = vmatprep.subr.bf16.mxu0 0
        %1309 = vmatpush1.bf16.xpose.msra.mxu0 0
        %1310 = vmatprep.subr.bf16.mxu0 0
        %1311 = vmatpush1.bf16.xpose.msra.mxu0 0
        %1312 = vmatprep.subr.bf16.mxu0 0
        %1313 = vmatpush1.bf16.xpose.msra.mxu0 0
        %1314 = vmatprep.mubr.bf16.mxu0 0
        %1315 = vmatmul.mubr.bf16.gmra.mrb[0].mxu0 %v1277
        %v1316 = vpop.f32.mrb[0].mxu0
        %v1317 = vadd.f32 0.0, %v1316
        %v1318 = vpop.f32.mrb[0].mxu0
        %v1319 = vpop.f32.mrb[0].mxu0
        %v1320 = vpop.f32.mrb[0].mxu0
        %1321 = vdwg.mxu0
        %v1323 = vsel %vm1183, %v1174, 0
        %v1326 = vsel %vm1183, %v1178, 0
        %1328 = vmatprep.subr.bf16.mxu0 0
        %1329 = vmatpush1.bf16.xpose.msra.mxu0 %v1326
        %1330 = vmatprep.subr.bf16.mxu0 0
        %1331 = vmatpush1.bf16.xpose.msra.mxu0 0
        %1332 = vmatprep.subr.bf16.mxu0 0
        %1333 = vmatpush1.bf16.xpose.msra.mxu0 0
        %1334 = vmatprep.subr.bf16.mxu0 0
        %1335 = vmatpush1.bf16.xpose.msra.mxu0 0
        %1336 = vmatprep.subr.bf16.mxu0 0
        %1337 = vmatpush1.bf16.xpose.msra.mxu0 0
        %1338 = vmatprep.subr.bf16.mxu0 0
        %1339 = vmatpush1.bf16.xpose.msra.mxu0 0
        %1340 = vmatprep.subr.bf16.mxu0 0
        %1341 = vmatpush1.bf16.xpose.msra.mxu0 0
        %1342 = vmatprep.subr.bf16.mxu0 0
        %1343 = vmatpush1.bf16.xpose.msra.mxu0 0
        %1344 = vmatprep.subr.bf16.mxu0 0
        %1345 = vmatpush1.bf16.xpose.msra.mxu0 0
        %1346 = vmatprep.subr.bf16.mxu0 0
        %1347 = vmatpush1.bf16.xpose.msra.mxu0 0
        %1348 = vmatprep.subr.bf16.mxu0 0
        %1349 = vmatpush1.bf16.xpose.msra.mxu0 0
        %1350 = vmatprep.subr.bf16.mxu0 0
        %1351 = vmatpush1.bf16.xpose.msra.mxu0 0
        %1352 = vmatprep.subr.bf16.mxu0 0
        %1353 = vmatpush1.bf16.xpose.msra.mxu0 0
        %1354 = vmatprep.subr.bf16.mxu0 0
        %1355 = vmatpush1.bf16.xpose.msra.mxu0 0
        %1356 = vmatprep.subr.bf16.mxu0 0
        %1357 = vmatpush1.bf16.xpose.msra.mxu0 0
        %1358 = vmatprep.subr.bf16.mxu0 0
        %1359 = vmatpush1.bf16.xpose.msra.mxu0 0
        %1360 = vmatprep.mubr.bf16.mxu0 0
        %1361 = vmatmul.mubr.bf16.gmra.mrb[0].mxu0 %v1323
        %v1362 = vpop.f32.mrb[0].mxu0
        %v1363 = vadd.f32 0.0, %v1362
        %v1364 = vpop.f32.mrb[0].mxu0
        %v1365 = vpop.f32.mrb[0].mxu0
        %v1366 = vpop.f32.mrb[0].mxu0
        %1367 = vdwg.mxu0
        %v1368 = vsel %vm1183, %v1225, -inf
        %1369 = vmax.xlane.f32.xlu0 %v1368
        %v1370 = vpop.xlane.xlu0 %1369
        %v1371 = vsel %vm1183, %v1271, -inf
        %1372 = vmax.xlane.f32.xlu0 %v1371
        %v1373 = vpop.xlane.xlu0 %1372
        %v1374 = vsel %vm1183, %v1317, -inf
        %1375 = vmax.xlane.f32.xlu0 %v1374
        %v1376 = vpop.xlane.xlu0 %1375
        %v1377 = vsel %vm1183, %v1363, -inf
        %1378 = vmax.xlane.f32.xlu0 %v1377
        %v1379 = vpop.xlane.xlu0 %1378
        %v1380 = vsub.f32 %v1225, %v1370
        %v1381 = vsub.f32 %v1271, %v1373
        %v1382 = vsub.f32 %v1317, %v1376
        %v1383 = vsub.f32 %v1363, %v1379
        %v1384 = vmul.f32 %v1380, 1.442695
        %v1385 = vpow.pop %v1384
        %v1386 = vmul.f32 %v1381, 1.442695
        %v1387 = vpow.pop %v1386
        %v1388 = vmul.f32 %v1382, 1.442695
        %v1389 = vpow.pop %v1388
        %v1390 = vmul.f32 %v1383, 1.442695
        %v1391 = vpow.pop %v1390
        %v1392 = vsel %vm1183, %v1385, 0.0
        %1393 = vadd.xlane.f32.xlu0 %v1392
        %v1394 = vpop.xlane.xlu0 %1393
        %v1395 = vsel %vm1183, %v1387, 0.0
        %1396 = vadd.xlane.f32.xlu0 %v1395
        %v1397 = vpop.xlane.xlu0 %1396
        %v1398 = vsel %vm1183, %v1389, 0.0
        %1399 = vadd.xlane.f32.xlu0 %v1398
        %v1400 = vpop.xlane.xlu0 %1399
        %v1401 = vsel %vm1183, %v1391, 0.0
        %1402 = vadd.xlane.f32.xlu0 %v1401
        %v1403 = vpop.xlane.xlu0 %1402
        %v1404 = vrcp.pop %v1394
        %v1405 = vrcp.pop %v1397
        %v1406 = vrcp.pop %v1400
        %v1407 = vrcp.pop %v1403
        %v1408 = vmul.f32 %v1385, %v1404
        %v1409 = vmul.f32 %v1387, %v1405
        %v1410 = vmul.f32 %v1389, %v1406
        %v1411 = vmul.f32 %v1391, %v1407
        %v1412 = vpack.c.bf16 %v1408, %v1408
        %v1413 = vpack.c.bf16 %v1409, %v1409
        %v1414 = vpack.c.bf16 %v1410, %v1410
        %v1415 = vpack.c.bf16 %v1411, %v1411
        %v1417 = vsel %vm1183, %v1412, 0
        %vm1419 = vcmask 1043456
        %v1421 = vsel %vm1419, %v1179, 0
        %1423 = vmatprep.subr.bf16.mxu0 0
        %1424 = vmatpush1.bf16.msra.mxu0 %v1421
        %1425 = vmatprep.subr.bf16.mxu0 0
        %1426 = vmatpush1.bf16.msra.mxu0 0
        %1427 = vmatprep.subr.bf16.mxu0 0
        %1428 = vmatpush1.bf16.msra.mxu0 0
        %1429 = vmatprep.subr.bf16.mxu0 0
        %1430 = vmatpush1.bf16.msra.mxu0 0
        %1431 = vmatprep.subr.bf16.mxu0 0
        %1432 = vmatpush1.bf16.msra.mxu0 0
        %1433 = vmatprep.subr.bf16.mxu0 0
        %1434 = vmatpush1.bf16.msra.mxu0 0
        %1435 = vmatprep.subr.bf16.mxu0 0
        %1436 = vmatpush1.bf16.msra.mxu0 0
        %1437 = vmatprep.subr.bf16.mxu0 0
        %1438 = vmatpush1.bf16.msra.mxu0 0
        %1439 = vmatprep.subr.bf16.mxu0 0
        %1440 = vmatpush1.bf16.msra.mxu0 0
        %1441 = vmatprep.subr.bf16.mxu0 0
        %1442 = vmatpush1.bf16.msra.mxu0 0
        %1443 = vmatprep.subr.bf16.mxu0 0
        %1444 = vmatpush1.bf16.msra.mxu0 0
        %1445 = vmatprep.subr.bf16.mxu0 0
        %1446 = vmatpush1.bf16.msra.mxu0 0
        %1447 = vmatprep.subr.bf16.mxu0 0
        %1448 = vmatpush1.bf16.msra.mxu0 0
        %1449 = vmatprep.subr.bf16.mxu0 0
        %1450 = vmatpush1.bf16.msra.mxu0 0
        %1451 = vmatprep.subr.bf16.mxu0 0
        %1452 = vmatpush1.bf16.msra.mxu0 0
        %1453 = vmatprep.subr.bf16.mxu0 0
        %1454 = vmatpush1.bf16.msra.mxu0 0
        %1455 = vmatprep.mubr.bf16.mxu0 0
        %1456 = vmatmul.mubr.bf16.gmra.mrb[0].mxu0 %v1417
        %v1457 = vpop.f32.mrb[0].mxu0
        %v1458 = vadd.f32 0.0, %v1457
        %v1459 = vpop.f32.mrb[0].mxu0
        %v1460 = vpop.f32.mrb[0].mxu0
        %v1461 = vpop.f32.mrb[0].mxu0
        %1462 = vdwg.mxu0
        %v1464 = vsel %vm1183, %v1413, 0
        %v1467 = vsel %vm1419, %v1180, 0
        %1469 = vmatprep.subr.bf16.mxu0 0
        %1470 = vmatpush1.bf16.msra.mxu0 %v1467
        %1471 = vmatprep.subr.bf16.mxu0 0
        %1472 = vmatpush1.bf16.msra.mxu0 0
        %1473 = vmatprep.subr.bf16.mxu0 0
        %1474 = vmatpush1.bf16.msra.mxu0 0
        %1475 = vmatprep.subr.bf16.mxu0 0
        %1476 = vmatpush1.bf16.msra.mxu0 0
        %1477 = vmatprep.subr.bf16.mxu0 0
        %1478 = vmatpush1.bf16.msra.mxu0 0
        %1479 = vmatprep.subr.bf16.mxu0 0
        %1480 = vmatpush1.bf16.msra.mxu0 0
        %1481 = vmatprep.subr.bf16.mxu0 0
        %1482 = vmatpush1.bf16.msra.mxu0 0
        %1483 = vmatprep.subr.bf16.mxu0 0
        %1484 = vmatpush1.bf16.msra.mxu0 0
        %1485 = vmatprep.subr.bf16.mxu0 0
        %1486 = vmatpush1.bf16.msra.mxu0 0
        %1487 = vmatprep.subr.bf16.mxu0 0
        %1488 = vmatpush1.bf16.msra.mxu0 0
        %1489 = vmatprep.subr.bf16.mxu0 0
        %1490 = vmatpush1.bf16.msra.mxu0 0
        %1491 = vmatprep.subr.bf16.mxu0 0
        %1492 = vmatpush1.bf16.msra.mxu0 0
        %1493 = vmatprep.subr.bf16.mxu0 0
        %1494 = vmatpush1.bf16.msra.mxu0 0
        %1495 = vmatprep.subr.bf16.mxu0 0
        %1496 = vmatpush1.bf16.msra.mxu0 0
        %1497 = vmatprep.subr.bf16.mxu0 0
        %1498 = vmatpush1.bf16.msra.mxu0 0
        %1499 = vmatprep.subr.bf16.mxu0 0
        %1500 = vmatpush1.bf16.msra.mxu0 0
        %1501 = vmatprep.mubr.bf16.mxu0 0
        %1502 = vmatmul.mubr.bf16.gmra.mrb[0].mxu0 %v1464
        %v1503 = vpop.f32.mrb[0].mxu0
        %v1504 = vadd.f32 0.0, %v1503
        %v1505 = vpop.f32.mrb[0].mxu0
        %v1506 = vpop.f32.mrb[0].mxu0
        %v1507 = vpop.f32.mrb[0].mxu0
        %1508 = vdwg.mxu0
        %v1510 = vsel %vm1183, %v1414, 0
        %v1513 = vsel %vm1419, %v1181, 0
        %1515 = vmatprep.subr.bf16.mxu0 0
        %1516 = vmatpush1.bf16.msra.mxu0 %v1513
        %1517 = vmatprep.subr.bf16.mxu0 0
        %1518 = vmatpush1.bf16.msra.mxu0 0
        %1519 = vmatprep.subr.bf16.mxu0 0
        %1520 = vmatpush1.bf16.msra.mxu0 0
        %1521 = vmatprep.subr.bf16.mxu0 0
        %1522 = vmatpush1.bf16.msra.mxu0 0
        %1523 = vmatprep.subr.bf16.mxu0 0
        %1524 = vmatpush1.bf16.msra.mxu0 0
        %1525 = vmatprep.subr.bf16.mxu0 0
        %1526 = vmatpush1.bf16.msra.mxu0 0
        %1527 = vmatprep.subr.bf16.mxu0 0
        %1528 = vmatpush1.bf16.msra.mxu0 0
        %1529 = vmatprep.subr.bf16.mxu0 0
        %1530 = vmatpush1.bf16.msra.mxu0 0
        %1531 = vmatprep.subr.bf16.mxu0 0
        %1532 = vmatpush1.bf16.msra.mxu0 0
        %1533 = vmatprep.subr.bf16.mxu0 0
        %1534 = vmatpush1.bf16.msra.mxu0 0
        %1535 = vmatprep.subr.bf16.mxu0 0
        %1536 = vmatpush1.bf16.msra.mxu0 0
        %1537 = vmatprep.subr.bf16.mxu0 0
        %1538 = vmatpush1.bf16.msra.mxu0 0
        %1539 = vmatprep.subr.bf16.mxu0 0
        %1540 = vmatpush1.bf16.msra.mxu0 0
        %1541 = vmatprep.subr.bf16.mxu0 0
        %1542 = vmatpush1.bf16.msra.mxu0 0
        %1543 = vmatprep.subr.bf16.mxu0 0
        %1544 = vmatpush1.bf16.msra.mxu0 0
        %1545 = vmatprep.subr.bf16.mxu0 0
        %1546 = vmatpush1.bf16.msra.mxu0 0
        %1547 = vmatprep.mubr.bf16.mxu0 0
        %1548 = vmatmul.mubr.bf16.gmra.mrb[0].mxu0 %v1510
        %v1549 = vpop.f32.mrb[0].mxu0
        %v1550 = vadd.f32 0.0, %v1549
        %v1551 = vpop.f32.mrb[0].mxu0
        %v1552 = vpop.f32.mrb[0].mxu0
        %v1553 = vpop.f32.mrb[0].mxu0
        %1554 = vdwg.mxu0
        %v1556 = vsel %vm1183, %v1415, 0
        %v1559 = vsel %vm1419, %v1182, 0
        %1561 = vmatprep.subr.bf16.mxu0 0
        %1562 = vmatpush1.bf16.msra.mxu0 %v1559
        %1563 = vmatprep.subr.bf16.mxu0 0
        %1564 = vmatpush1.bf16.msra.mxu0 0
        %1565 = vmatprep.subr.bf16.mxu0 0
        %1566 = vmatpush1.bf16.msra.mxu0 0
        %1567 = vmatprep.subr.bf16.mxu0 0
        %1568 = vmatpush1.bf16.msra.mxu0 0
        %1569 = vmatprep.subr.bf16.mxu0 0
        %1570 = vmatpush1.bf16.msra.mxu0 0
        %1571 = vmatprep.subr.bf16.mxu0 0
        %1572 = vmatpush1.bf16.msra.mxu0 0
        %1573 = vmatprep.subr.bf16.mxu0 0
        %1574 = vmatpush1.bf16.msra.mxu0 0
        %1575 = vmatprep.subr.bf16.mxu0 0
        %1576 = vmatpush1.bf16.msra.mxu0 0
        %1577 = vmatprep.subr.bf16.mxu0 0
        %1578 = vmatpush1.bf16.msra.mxu0 0
        %1579 = vmatprep.subr.bf16.mxu0 0
        %1580 = vmatpush1.bf16.msra.mxu0 0
        %1581 = vmatprep.subr.bf16.mxu0 0
        %1582 = vmatpush1.bf16.msra.mxu0 0
        %1583 = vmatprep.subr.bf16.mxu0 0
        %1584 = vmatpush1.bf16.msra.mxu0 0
        %1585 = vmatprep.subr.bf16.mxu0 0
        %1586 = vmatpush1.bf16.msra.mxu0 0
        %1587 = vmatprep.subr.bf16.mxu0 0
        %1588 = vmatpush1.bf16.msra.mxu0 0
        %1589 = vmatprep.subr.bf16.mxu0 0
        %1590 = vmatpush1.bf16.msra.mxu0 0
        %1591 = vmatprep.subr.bf16.mxu0 0
        %1592 = vmatpush1.bf16.msra.mxu0 0
        %1593 = vmatprep.mubr.bf16.mxu0 0
        %1594 = vmatmul.mubr.bf16.gmra.mrb[0].mxu0 %v1556
        %v1595 = vpop.f32.mrb[0].mxu0
        %v1596 = vadd.f32 0.0, %v1595
        %v1597 = vpop.f32.mrb[0].mxu0
        %v1598 = vpop.f32.mrb[0].mxu0
        %v1599 = vpop.f32.mrb[0].mxu0
        %1600 = vdwg.mxu0
        %v1601 = vpack.c.bf16 %v1458, %v1458
        %v1602 = vpack.c.bf16 %v1504, %v1504
        %v1603 = vpack.c.bf16 %v1550, %v1550
        %v1604 = vpack.c.bf16 %v1596, %v1596
        %v1605 = vld [vmem:[%s385] sm:$0xf]
        %v1606 = vld [vmem:[%s385 + $0x4] sm:$0xf]
        %v1607 = vld [vmem:[%s385 + $0x8] sm:$0xf]
        %v1608 = vld [vmem:[%s385 + $0xc] sm:$0xf]
        %v1610 = vsel %vm1183, %v1601, 0
        %v1613 = vsel %vm1419, %v1605, 0
        %1615 = vmatprep.subr.bf16.mxu0 0
        %1616 = vmatpush1.bf16.msra.mxu0 %v1613
        %1617 = vmatprep.subr.bf16.mxu0 0
        %1618 = vmatpush1.bf16.msra.mxu0 0
        %1619 = vmatprep.subr.bf16.mxu0 0
        %1620 = vmatpush1.bf16.msra.mxu0 0
        %1621 = vmatprep.subr.bf16.mxu0 0
        %1622 = vmatpush1.bf16.msra.mxu0 0
        %1623 = vmatprep.subr.bf16.mxu0 0
        %1624 = vmatpush1.bf16.msra.mxu0 0
        %1625 = vmatprep.subr.bf16.mxu0 0
        %1626 = vmatpush1.bf16.msra.mxu0 0
        %1627 = vmatprep.subr.bf16.mxu0 0
        %1628 = vmatpush1.bf16.msra.mxu0 0
        %1629 = vmatprep.subr.bf16.mxu0 0
        %1630 = vmatpush1.bf16.msra.mxu0 0
        %1631 = vmatprep.subr.bf16.mxu0 0
        %1632 = vmatpush1.bf16.msra.mxu0 0
        %1633 = vmatprep.subr.bf16.mxu0 0
        %1634 = vmatpush1.bf16.msra.mxu0 0
        %1635 = vmatprep.subr.bf16.mxu0 0
        %1636 = vmatpush1.bf16.msra.mxu0 0
        %1637 = vmatprep.subr.bf16.mxu0 0
        %1638 = vmatpush1.bf16.msra.mxu0 0
        %1639 = vmatprep.subr.bf16.mxu0 0
        %1640 = vmatpush1.bf16.msra.mxu0 0
        %1641 = vmatprep.subr.bf16.mxu0 0
        %1642 = vmatpush1.bf16.msra.mxu0 0
        %1643 = vmatprep.subr.bf16.mxu0 0
        %1644 = vmatpush1.bf16.msra.mxu0 0
        %1645 = vmatprep.subr.bf16.mxu0 0
        %1646 = vmatpush1.bf16.msra.mxu0 0
        %1647 = vmatprep.mubr.bf16.mxu0 0
        %1648 = vmatmul.mubr.bf16.gmra.mrb[0].mxu0 %v1610
        %v1649 = vpop.f32.mrb[0].mxu0
        %v1650 = vadd.f32 0.0, %v1649
        %v1651 = vpop.f32.mrb[0].mxu0
        %v1652 = vpop.f32.mrb[0].mxu0
        %v1653 = vpop.f32.mrb[0].mxu0
        %1654 = vdwg.mxu0
        %v1656 = vsel %vm1183, %v1602, 0
        %v1659 = vsel %vm1419, %v1606, 0
        %1661 = vmatprep.subr.bf16.mxu0 0
        %1662 = vmatpush1.bf16.msra.mxu0 %v1659
        %1663 = vmatprep.subr.bf16.mxu0 0
        %1664 = vmatpush1.bf16.msra.mxu0 0
        %1665 = vmatprep.subr.bf16.mxu0 0
        %1666 = vmatpush1.bf16.msra.mxu0 0
        %1667 = vmatprep.subr.bf16.mxu0 0
        %1668 = vmatpush1.bf16.msra.mxu0 0
        %1669 = vmatprep.subr.bf16.mxu0 0
        %1670 = vmatpush1.bf16.msra.mxu0 0
        %1671 = vmatprep.subr.bf16.mxu0 0
        %1672 = vmatpush1.bf16.msra.mxu0 0
        %1673 = vmatprep.subr.bf16.mxu0 0
        %1674 = vmatpush1.bf16.msra.mxu0 0
        %1675 = vmatprep.subr.bf16.mxu0 0
        %1676 = vmatpush1.bf16.msra.mxu0 0
        %1677 = vmatprep.subr.bf16.mxu0 0
        %1678 = vmatpush1.bf16.msra.mxu0 0
        %1679 = vmatprep.subr.bf16.mxu0 0
        %1680 = vmatpush1.bf16.msra.mxu0 0
        %1681 = vmatprep.subr.bf16.mxu0 0
        %1682 = vmatpush1.bf16.msra.mxu0 0
        %1683 = vmatprep.subr.bf16.mxu0 0
        %1684 = vmatpush1.bf16.msra.mxu0 0
        %1685 = vmatprep.subr.bf16.mxu0 0
        %1686 = vmatpush1.bf16.msra.mxu0 0
        %1687 = vmatprep.subr.bf16.mxu0 0
        %1688 = vmatpush1.bf16.msra.mxu0 0
        %1689 = vmatprep.subr.bf16.mxu0 0
        %1690 = vmatpush1.bf16.msra.mxu0 0
        %1691 = vmatprep.subr.bf16.mxu0 0
        %1692 = vmatpush1.bf16.msra.mxu0 0
        %1693 = vmatprep.mubr.bf16.mxu0 0
        %1694 = vmatmul.mubr.bf16.gmra.mrb[0].mxu0 %v1656
        %v1695 = vpop.f32.mrb[0].mxu0
        %v1696 = vadd.f32 0.0, %v1695
        %v1697 = vpop.f32.mrb[0].mxu0
        %v1698 = vpop.f32.mrb[0].mxu0
        %v1699 = vpop.f32.mrb[0].mxu0
        %1700 = vdwg.mxu0
        %v1702 = vsel %vm1183, %v1603, 0
        %v1705 = vsel %vm1419, %v1607, 0
        %1707 = vmatprep.subr.bf16.mxu0 0
        %1708 = vmatpush1.bf16.msra.mxu0 %v1705
        %1709 = vmatprep.subr.bf16.mxu0 0
        %1710 = vmatpush1.bf16.msra.mxu0 0
        %1711 = vmatprep.subr.bf16.mxu0 0
        %1712 = vmatpush1.bf16.msra.mxu0 0
        %1713 = vmatprep.subr.bf16.mxu0 0
        %1714 = vmatpush1.bf16.msra.mxu0 0
        %1715 = vmatprep.subr.bf16.mxu0 0
        %1716 = vmatpush1.bf16.msra.mxu0 0
        %1717 = vmatprep.subr.bf16.mxu0 0
        %1718 = vmatpush1.bf16.msra.mxu0 0
        %1719 = vmatprep.subr.bf16.mxu0 0
        %1720 = vmatpush1.bf16.msra.mxu0 0
        %1721 = vmatprep.subr.bf16.mxu0 0
        %1722 = vmatpush1.bf16.msra.mxu0 0
        %1723 = vmatprep.subr.bf16.mxu0 0
        %1724 = vmatpush1.bf16.msra.mxu0 0
        %1725 = vmatprep.subr.bf16.mxu0 0
        %1726 = vmatpush1.bf16.msra.mxu0 0
        %1727 = vmatprep.subr.bf16.mxu0 0
        %1728 = vmatpush1.bf16.msra.mxu0 0
        %1729 = vmatprep.subr.bf16.mxu0 0
        %1730 = vmatpush1.bf16.msra.mxu0 0
        %1731 = vmatprep.subr.bf16.mxu0 0
        %1732 = vmatpush1.bf16.msra.mxu0 0
        %1733 = vmatprep.subr.bf16.mxu0 0
        %1734 = vmatpush1.bf16.msra.mxu0 0
        %1735 = vmatprep.subr.bf16.mxu0 0
        %1736 = vmatpush1.bf16.msra.mxu0 0
        %1737 = vmatprep.subr.bf16.mxu0 0
        %1738 = vmatpush1.bf16.msra.mxu0 0
        %1739 = vmatprep.mubr.bf16.mxu0 0
        %1740 = vmatmul.mubr.bf16.gmra.mrb[0].mxu0 %v1702
        %v1741 = vpop.f32.mrb[0].mxu0
        %v1742 = vadd.f32 0.0, %v1741
        %v1743 = vpop.f32.mrb[0].mxu0
        %v1744 = vpop.f32.mrb[0].mxu0
        %v1745 = vpop.f32.mrb[0].mxu0
        %1746 = vdwg.mxu0
        %v1748 = vsel %vm1183, %v1604, 0
        %v1751 = vsel %vm1419, %v1608, 0
        %1753 = vmatprep.subr.bf16.mxu0 0
        %1754 = vmatpush1.bf16.msra.mxu0 %v1751
        %1755 = vmatprep.subr.bf16.mxu0 0
        %1756 = vmatpush1.bf16.msra.mxu0 0
        %1757 = vmatprep.subr.bf16.mxu0 0
        %1758 = vmatpush1.bf16.msra.mxu0 0
        %1759 = vmatprep.subr.bf16.mxu0 0
        %1760 = vmatpush1.bf16.msra.mxu0 0
        %1761 = vmatprep.subr.bf16.mxu0 0
        %1762 = vmatpush1.bf16.msra.mxu0 0
        %1763 = vmatprep.subr.bf16.mxu0 0
        %1764 = vmatpush1.bf16.msra.mxu0 0
        %1765 = vmatprep.subr.bf16.mxu0 0
        %1766 = vmatpush1.bf16.msra.mxu0 0
        %1767 = vmatprep.subr.bf16.mxu0 0
        %1768 = vmatpush1.bf16.msra.mxu0 0
        %1769 = vmatprep.subr.bf16.mxu0 0
        %1770 = vmatpush1.bf16.msra.mxu0 0
        %1771 = vmatprep.subr.bf16.mxu0 0
        %1772 = vmatpush1.bf16.msra.mxu0 0
        %1773 = vmatprep.subr.bf16.mxu0 0
        %1774 = vmatpush1.bf16.msra.mxu0 0
        %1775 = vmatprep.subr.bf16.mxu0 0
        %1776 = vmatpush1.bf16.msra.mxu0 0
        %1777 = vmatprep.subr.bf16.mxu0 0
        %1778 = vmatpush1.bf16.msra.mxu0 0
        %1779 = vmatprep.subr.bf16.mxu0 0
        %1780 = vmatpush1.bf16.msra.mxu0 0
        %1781 = vmatprep.subr.bf16.mxu0 0
        %1782 = vmatpush1.bf16.msra.mxu0 0
        %1783 = vmatprep.subr.bf16.mxu0 0
        %1784 = vmatpush1.bf16.msra.mxu0 0
        %1785 = vmatprep.mubr.bf16.mxu0 0
        %1786 = vmatmul.mubr.bf16.gmra.mrb[0].mxu0 %v1748
        %v1787 = vpop.f32.mrb[0].mxu0
        %v1788 = vadd.f32 0.0, %v1787
        %v1789 = vpop.f32.mrb[0].mxu0
        %v1790 = vpop.f32.mrb[0].mxu0
        %v1791 = vpop.f32.mrb[0].mxu0
        %1792 = vdwg.mxu0
        %v1793 = vsel %vm555, %v1650, 0.0
        %v1794 = vsel %vm555, %v1696, 0.0
        %v1795 = vadd.f32 %v1793, %v1794
        %v1796 = vsel %vm555, %v1742, 0.0
        %v1797 = vadd.f32 %v1795, %v1796
        %v1798 = vsel %vm555, %v1788, 0.0
        %v1799 = vadd.f32 %v1797, %v1798
        %v1800 = vlaneseq
        %v1801 = vshrl.u32 %v1800, 7
        %v1802 = vsub.s32 0, %v1801
        %v1803 = vrot.slane %v410, %v1802
        %v1804 = vadd.f32 %v1799, %v1803
        %v1805 = vadd.f32 %v408, %v1804
        %v1806 = vsel %vm555, %v1805, 0.0
        %1807 = vadd.xlane.f32.xlu0 %v1806
        %v1808 = vpop.xlane.xlu0 %1807
        %v1809 = vrcp.pop 32.0
        %v1810 = vmul.f32 %v1808, %v1809
        %v1811 = vmul.f32 %v1805, %v1805
        %v1812 = vsel %vm555, %v1811, 0.0
        %1813 = vadd.xlane.f32.xlu0 %v1812
        %v1814 = vpop.xlane.xlu0 %1813
        %v1815 = vmul.f32 %v1814, %v1809
        %v1816 = vsub.f32 %v1805, %v1810
        %v1817 = vmul.f32 %v1810, %v1810
        %v1818 = vsub.f32 %v1815, %v1817
        %v1819 = vadd.f32 %v1818, 1e-05
        %v1820 = vrsqrt.pop %v1819
        %v1821 = vmul.f32 %v1816, %v1820
        %v1822 = vlaneseq
        %v1823 = vshrl.u32 %v1822, 7
        %v1824 = vsub.s32 1, %v1823
        %v1825 = vrot.slane %v410, %v1824
        %v1826 = vmul.f32 %v1821, %v1825
        %v1827 = vlaneseq
        %v1828 = vshrl.u32 %v1827, 7
        %v1829 = vsub.s32 2, %v1828
        %v1830 = vrot.slane %v410, %v1829
        %v1831 = vadd.f32 %v1826, %v1830
        %v1832 = vpack.c.bf16 %v1831, %v1831
        %v1833 = vld [vmem:[%s390] sm:$0xf]
        %v1834 = vld [vmem:[%s390 + $0x4] sm:$0xf]
        %v1835 = vld [vmem:[%s390 + $0x8] sm:$0xf]
        %v1836 = vld [vmem:[%s390 + $0xc] sm:$0xf]
        %v1837 = vlaneseq
        %v1838 = vshrl.u32 %v1837, 7
        %v1839 = vsub.s32 3, %v1838
        %v1840 = vrot.slane %v410, %v1839
        %v1845 = vunpack.c.l.b16 %v1833
        %v1846 = vunpack.c.l.b16 %v1834
        %v1847 = vunpack.c.l.b16 %v1835
        %v1848 = vunpack.c.l.b16 %v1836
        %v1849 = vpack.c.b16 %v1846, %v1845
        %v1850 = vpack.c.b16 %v1848, %v1847
        %v1854 = vsel %vm555, %v1832, 0
        %1856 = vmatprep.subr.bf16.mxu0 0
        %1857 = vmatpush1.bf16.msra.mxu0 %v1849
        %1858 = vmatprep.subr.bf16.mxu0 0
        %1859 = vmatpush1.bf16.msra.mxu0 %v1850
        %1860 = vmatprep.subr.bf16.mxu0 0
        %1861 = vmatpush1.bf16.msra.mxu0 0
        %1862 = vmatprep.subr.bf16.mxu0 0
        %1863 = vmatpush1.bf16.msra.mxu0 0
        %1864 = vmatprep.subr.bf16.mxu0 0
        %1865 = vmatpush1.bf16.msra.mxu0 0
        %1866 = vmatprep.subr.bf16.mxu0 0
        %1867 = vmatpush1.bf16.msra.mxu0 0
        %1868 = vmatprep.subr.bf16.mxu0 0
        %1869 = vmatpush1.bf16.msra.mxu0 0
        %1870 = vmatprep.subr.bf16.mxu0 0
        %1871 = vmatpush1.bf16.msra.mxu0 0
        %1872 = vmatprep.subr.bf16.mxu0 0
        %1873 = vmatpush1.bf16.msra.mxu0 0
        %1874 = vmatprep.subr.bf16.mxu0 0
        %1875 = vmatpush1.bf16.msra.mxu0 0
        %1876 = vmatprep.subr.bf16.mxu0 0
        %1877 = vmatpush1.bf16.msra.mxu0 0
        %1878 = vmatprep.subr.bf16.mxu0 0
        %1879 = vmatpush1.bf16.msra.mxu0 0
        %1880 = vmatprep.subr.bf16.mxu0 0
        %1881 = vmatpush1.bf16.msra.mxu0 0
        %1882 = vmatprep.subr.bf16.mxu0 0
        %1883 = vmatpush1.bf16.msra.mxu0 0
        %1884 = vmatprep.subr.bf16.mxu0 0
        %1885 = vmatpush1.bf16.msra.mxu0 0
        %1886 = vmatprep.subr.bf16.mxu0 0
        %1887 = vmatpush1.bf16.msra.mxu0 0
        %1888 = vmatprep.mubr.bf16.mxu0 0
        %1889 = vmatmul.mubr.bf16.gmra.mrb[0].mxu0 %v1854
        %v1890 = vpop.f32.mrb[0].mxu0
        %v1891 = vadd.f32 %v1840, %v1890
        %v1892 = vpop.f32.mrb[0].mxu0
        %v1893 = vpop.f32.mrb[0].mxu0
        %v1894 = vpop.f32.mrb[0].mxu0
        %1895 = vdwg.mxu0
        %v1896 = vmax.f32 %v1891, 0.0
        %v1897 = vpack.c.bf16 %v1896, %v1896
        %v1898 = vld [vmem:[%s395] sm:$0xf]
        %v1899 = vld [vmem:[%s395 + $0x4] sm:$0xf]
        %v1900 = vld [vmem:[%s395 + $0x8] sm:$0xf]
        %v1901 = vld [vmem:[%s395 + $0xc] sm:$0xf]
        %v1902 = vld [vmem:[%s395 + $0x10] sm:$0xf]
        %v1903 = vld [vmem:[%s395 + $0x14] sm:$0xf]
        %v1904 = vld [vmem:[%s395 + $0x18] sm:$0xf]
        %v1905 = vld [vmem:[%s395 + $0x1c] sm:$0xf]
        %v1906 = vlaneseq
        %v1907 = vshrl.u32 %v1906, 7
        %v1908 = vsub.s32 4, %v1907
        %v1909 = vrot.slane %v410, %v1908
        %v1918 = vunpack.c.l.b16 %v1898
        %v1919 = vunpack.c.l.b16 %v1899
        %v1920 = vunpack.c.l.b16 %v1900
        %v1921 = vunpack.c.l.b16 %v1901
        %v1922 = vunpack.c.l.b16 %v1902
        %v1923 = vunpack.c.l.b16 %v1903
        %v1924 = vunpack.c.l.b16 %v1904
        %v1925 = vunpack.c.l.b16 %v1905
        %v1926 = vpack.c.b16 %v1919, %v1918
        %v1927 = vpack.c.b16 %v1921, %v1920
        %v1928 = vpack.c.b16 %v1923, %v1922
        %v1929 = vpack.c.b16 %v1925, %v1924
        %vm1934 = vcmask 523264
        %v1936 = vsel %vm1934, %v1897, 0
        %1938 = vmatprep.subr.bf16.mxu0 0
        %1939 = vmatpush1.bf16.msra.mxu0 %v1926
        %1940 = vmatprep.subr.bf16.mxu0 0
        %1941 = vmatpush1.bf16.msra.mxu0 %v1927
        %1942 = vmatprep.subr.bf16.mxu0 0
        %1943 = vmatpush1.bf16.msra.mxu0 %v1928
        %1944 = vmatprep.subr.bf16.mxu0 0
        %1945 = vmatpush1.bf16.msra.mxu0 %v1929
        %1946 = vmatprep.subr.bf16.mxu0 0
        %1947 = vmatpush1.bf16.msra.mxu0 0
        %1948 = vmatprep.subr.bf16.mxu0 0
        %1949 = vmatpush1.bf16.msra.mxu0 0
        %1950 = vmatprep.subr.bf16.mxu0 0
        %1951 = vmatpush1.bf16.msra.mxu0 0
        %1952 = vmatprep.subr.bf16.mxu0 0
        %1953 = vmatpush1.bf16.msra.mxu0 0
        %1954 = vmatprep.subr.bf16.mxu0 0
        %1955 = vmatpush1.bf16.msra.mxu0 0
        %1956 = vmatprep.subr.bf16.mxu0 0
        %1957 = vmatpush1.bf16.msra.mxu0 0
        %1958 = vmatprep.subr.bf16.mxu0 0
        %1959 = vmatpush1.bf16.msra.mxu0 0
        %1960 = vmatprep.subr.bf16.mxu0 0
        %1961 = vmatpush1.bf16.msra.mxu0 0
        %1962 = vmatprep.subr.bf16.mxu0 0
        %1963 = vmatpush1.bf16.msra.mxu0 0
        %1964 = vmatprep.subr.bf16.mxu0 0
        %1965 = vmatpush1.bf16.msra.mxu0 0
        %1966 = vmatprep.subr.bf16.mxu0 0
        %1967 = vmatpush1.bf16.msra.mxu0 0
        %1968 = vmatprep.subr.bf16.mxu0 0
        %1969 = vmatpush1.bf16.msra.mxu0 0
        %1970 = vmatprep.mubr.bf16.mxu0 0
        %1971 = vmatmul.mubr.bf16.gmra.mrb[0].mxu0 %v1936
        %v1972 = vpop.f32.mrb[0].mxu0
        %v1973 = vadd.f32 %v1909, %v1972
        %v1974 = vpop.f32.mrb[0].mxu0
        %v1975 = vpop.f32.mrb[0].mxu0
        %v1976 = vpop.f32.mrb[0].mxu0
        %1977 = vdwg.mxu0
        %v1978 = vadd.f32 %v1831, %v1973
        %v1979 = vsel %vm555, %v1978, 0.0
        %1980 = vadd.xlane.f32.xlu0 %v1979
        %v1981 = vpop.xlane.xlu0 %1980
        %v1982 = vmul.f32 %v1981, %v1809
        %v1983 = vmul.f32 %v1978, %v1978
        %v1984 = vsel %vm555, %v1983, 0.0
        %1985 = vadd.xlane.f32.xlu0 %v1984
        %v1986 = vpop.xlane.xlu0 %1985
        %v1987 = vmul.f32 %v1986, %v1809
        %v1988 = vsub.f32 %v1978, %v1982
        %v1989 = vmul.f32 %v1982, %v1982
        %v1990 = vsub.f32 %v1987, %v1989
        %v1991 = vadd.f32 %v1990, 1e-05
        %v1992 = vrsqrt.pop %v1991
        %v1993 = vmul.f32 %v1988, %v1992
        %v1994 = vlaneseq
        %v1995 = vshrl.u32 %v1994, 7
        %v1996 = vsub.s32 5, %v1995
        %v1997 = vrot.slane %v410, %v1996
        %v1998 = vmul.f32 %v1993, %v1997
        %v1999 = vlaneseq
        %v2000 = vshrl.u32 %v1999, 7
        %v2001 = vsub.s32 6, %v2000
        %v2002 = vrot.slane %v410, %v2001
        %v2003 = vadd.f32 %v1998, %v2002
        %2004 = vst.msk [vmem:[%s367] sm:$0xff] %vm555, %v2003
        %s2005 = sand.u32 %s223, 1
        %s2006 = scalar_lea.sflag [#allocation3], %s2005
        %s2007 = sand.u32 %s223, 1
        %s2008 = smul.addr %s2007, 8
        %s2009 = scalar_lea.vmem [#allocation2], %s2008
        // Predicated region
        $region53: #{tpu_custom_call.1} parent=47 // pred_check
          %p2010 = pneg %p233
        $region54: #{tpu_custom_call.1} parent=47 // pred_check_branch
          %2012 = sbr.rel (%p2010) target = $region56
        $region55: #{tpu_custom_call.1} parent=47 // pred_region
          %s2014 = ssub.s32 128, 128
          %2015 = vsyncadd %s2006, %s2014
          %s2016 = smul.addr %s25, 128
          %s2017 = scalar_lea.hbm %s7, %s2016
          %s2019 = sshll.u32 %s2009, 4
          %s2020 = int_to_ptr.vmem [resolvable:$true] %s2019
          %2022 = dma.vmem_to_hbm [thread:$0]  %s2020, 128, %s2017, %s2006
        $region56: #{tpu_custom_call.1} parent=47 // pred_fallthru
          _
      $region48: #{tpu_custom_call.1} parent=5 // pred_fallthru
        _
      %p2023 = scmp.le.s32.totalorder 2, %s16
      // Predicated region
      $region57: #{tpu_custom_call.1} parent=5 // pred_check
        %p2024 = pneg %p2023
      $region58: #{tpu_custom_call.1} parent=5 // pred_check_branch
        %2026 = sbr.rel (%p2024) target = $region60
      $region59: #{tpu_custom_call.1} parent=5 // pred_region
        %s2027 = ssub.s32 %s16, 2
        // Predicated region
        $region61: #{tpu_custom_call.1} parent=59 // pred_check
          %p2028 = pneg %p239
        $region62: #{tpu_custom_call.1} parent=59 // pred_check_branch
          %2030 = sbr.rel (%p2028) target = $region64
        $region63: #{tpu_custom_call.1} parent=59 // pred_region
          %s2031 = sand.u32 %s224, 1
          %s2032 = scalar_lea.sflag [#allocation3], %s2031
          %s2033 = sand.u32 %s224, 1
          %s2034 = smul.addr %s2033, 8
          %s2035 = scalar_lea.vmem [#allocation2], %s2034
          %2036 = dma.done %s2032, 128
        $region64: #{tpu_custom_call.1} parent=59 // pred_fallthru
          _
      $region60: #{tpu_custom_call.1} parent=5 // pred_fallthru
        _
    $region6: #{tpu_custom_call.1} parent=1 // loop_footer
      %s20 = sadd.s32 1, %s16
    $region7: #{tpu_custom_call.1} parent=1 // loop_footer_branch
      %15 = sbr.rel target = $region3
    $region8: #{tpu_custom_call.1} parent=1 // loop_exit
      _
    %2037 = vsyncpa [#allocation3], 1
    %s2038 = scalar_lea.sflag [#allocation3], 1
    %2039 = vsyncpa %s2038, 1

</llo_original>
